<compile_context>
chip_gen: v7x
topology: tpu7x:2x2x1
jax: 0.10.0
libtpu: 0.0.40
codegen_flags: <defaults>
</compile_context>

<pallas_src>
import functools

import jax
import jax.numpy as jnp
from jax.experimental import pallas as pl
from jax.experimental.pallas import tpu as pltpu


# ----- Packed-parameter slab layout (row bands, all 8-aligned, lane offset 0) -----
_W2_ROW = 0     # (100, 10)  layer-2 weight, stored as (out, in)
_B2_ROW = 104   # (100, 1)   layer-2 bias column
_W3_ROW = 208   # (10, 100)  layer-3 weight, stored as (out, in)
_B3_ROW = 224   # (10, 1)    layer-3 bias column
_W1_ROW = 240   # (10, 1)    layer-1 weight column (in_features = 1)
_B1_ROW = 256   # (10, 1)    layer-1 bias column
_W4_ROW = 272   # (10, 1)    layer-4 weight column (out_features = 1)
_B4_ROW = 288   # (1, 1)     layer-4 bias scalar
_PK_ROWS = 296  # multiple of 8
_PK_COLS = 128


def mlp_kernel(x_ref, pk_ref, o_ref):
    # Layout: activations are (features, tm) with the batch tile on the lane axis.
    x = x_ref[...]                                            # (1, tm)

    # Layer 1: Linear(1->10). K=1 => pure VPU broadcast multiply.
    w1 = pk_ref[_W1_ROW:_W1_ROW + 10, 0:1]                    # (10, 1)
    b1 = pk_ref[_B1_ROW:_B1_ROW + 10, 0:1]                    # (10, 1)
    h1 = jnp.maximum(w1 * x + b1, 0.0)                        # (10, tm)

    # Layer 2: Linear(10->100) as (100,10) @ (10,tm) — lane-dense MXU matmul.
    w2 = pk_ref[_W2_ROW:_W2_ROW + 100, 0:10]                  # (100, 10)
    b2 = pk_ref[_B2_ROW:_B2_ROW + 100, 0:1]                   # (100, 1)
    h2 = jnp.dot(w2, h1, preferred_element_type=jnp.float32,
                 precision=jax.lax.Precision.HIGHEST) + b2
    h2 = jnp.maximum(h2, 0.0)                                 # (100, tm)

    # Layer 3: Linear(100->10) as (10,100) @ (100,tm).
    w3 = pk_ref[_W3_ROW:_W3_ROW + 10, 0:100]                  # (10, 100)
    b3 = pk_ref[_B3_ROW:_B3_ROW + 10, 0:1]                    # (10, 1)
    h3 = jnp.dot(w3, h2, preferred_element_type=jnp.float32,
                 precision=jax.lax.Precision.HIGHEST) + b3
    h3 = jnp.maximum(h3, 0.0)                                 # (10, tm)

    # Layer 4: Linear(10->1). N_out=1 => VPU multiply + small sublane reduce.
    w4 = pk_ref[_W4_ROW:_W4_ROW + 10, 0:1]                    # (10, 1)
    b4 = pk_ref[_B4_ROW:_B4_ROW + 1, 0:1]                     # (1, 1)
    out = jnp.sum(w4 * h3, axis=0, keepdims=True) + b4        # (1, tm)

    o_ref[...] = out.astype(o_ref.dtype)


def prepack_params(params):
    """One-time repack of PyTorch-layout params into the kernel's packed slab.

    Call this once at init (NOT per forward call): it replaces the eight
    per-call transpose/reshape ops and collapses nine tiny DMAs into one.
    """
    w1, b1, w2, b2, w3, b3, w4, b4 = params   # w:(in,out), b:(1,out)
    pk = jnp.zeros((_PK_ROWS, _PK_COLS), jnp.float32)
    pk = pk.at[_W2_ROW:_W2_ROW + 100, 0:10].set(w2.T)                 # (100, 10)
    pk = pk.at[_B2_ROW:_B2_ROW + 100, 0:1].set(b2.reshape(100, 1))
    pk = pk.at[_W3_ROW:_W3_ROW + 10, 0:100].set(w3.T)                 # (10, 100)
    pk = pk.at[_B3_ROW:_B3_ROW + 10, 0:1].set(b3.reshape(10, 1))
    pk = pk.at[_W1_ROW:_W1_ROW + 10, 0:1].set(w1.reshape(1, 10).T)
    pk = pk.at[_B1_ROW:_B1_ROW + 10, 0:1].set(b1.reshape(10, 1))
    pk = pk.at[_W4_ROW:_W4_ROW + 10, 0:1].set(w4.reshape(10, 1))
    pk = pk.at[_B4_ROW:_B4_ROW + 1, 0:1].set(b4.reshape(1, 1))
    return pk


@functools.partial(jax.jit, static_argnames=("tm",))
def mlp_forward(x, packed_params, *, tm=128):
    """x: (N, 1) float32; packed_params: output of prepack_params.

    Returns (N, 1) float32.  tm: lane-tile (batch) size, multiple of 128.
    Guidance: tm=128 everywhere is safe; tm=256 also fine on v6e/v7x; do not
    exceed 256 (the (100, tm) intermediate would exhaust the 64-vreg file).
    """
    assert tm % 128 == 0, "tm must be a multiple of 128 (lane width)"
    N = x.shape[0]
    n_pad = ((N + tm - 1) // tm) * tm

    # (N,1) -> (1,N) is a layout-preserving (free) reshape; pad only if needed.
    x_row = x.reshape(1, N)
    if n_pad != N:
        x_row = jnp.pad(x_row, ((0, 0), (0, n_pad - N)))

    grid = (n_pad // tm,)

    out_row = pl.pallas_call(
        mlp_kernel,
        out_shape=jax.ShapeDtypeStruct((1, n_pad), jnp.float32),
        grid_spec=pltpu.PrefetchScalarGridSpec(
            num_scalar_prefetch=0,
            grid=grid,
            in_specs=[
                pl.BlockSpec((1, tm), lambda i: (0, i)),            # lane-dense batch tile
                pl.BlockSpec((_PK_ROWS, _PK_COLS), lambda i: (0, 0)),  # constant param slab
            ],
            out_specs=pl.BlockSpec((1, tm), lambda i: (0, i)),      # lane-dense output
        ),
        compiler_params=pltpu.CompilerParams(
            dimension_semantics=("parallel",)),
    )(x_row, packed_params)

    out = out_row.reshape(n_pad, 1)
    if n_pad != N:
        out = out[:N]
    return out


def init_params(key):
    """Deterministic init mimicking nn.Linear's uniform(-1/sqrt(fan_in), 1/sqrt(fan_in)).
    Weights stored as (in_features, out_features), biases as (1, out_features)."""
    dims = [(1, 10), (10, 100), (100, 10), (10, 1)]
    params = []
    keys = jax.random.split(key, 2 * len(dims))
    for li, (fan_in, fan_out) in enumerate(dims):
        bound = 1.0 / jnp.sqrt(jnp.float32(fan_in))
        w = jax.random.uniform(keys[2 * li], (fan_in, fan_out),
                               minval=-bound, maxval=bound, dtype=jnp.float32)
        b = jax.random.uniform(keys[2 * li + 1], (1, fan_out),
                               minval=-bound, maxval=bound, dtype=jnp.float32)
        params += [w, b]
    return tuple(params)


def reference_forward(x, params):
    w1, b1, w2, b2, w3, b3, w4, b4 = params
    hi = jax.lax.Precision.HIGHEST
    h = jnp.maximum(jnp.dot(x, w1, precision=hi) + b1, 0.0)
    h = jnp.maximum(jnp.dot(h, w2, precision=hi) + b2, 0.0)
    h = jnp.maximum(jnp.dot(h, w3, precision=hi) + b3, 0.0)
    return jnp.dot(h, w4, precision=hi) + b4


if __name__ == "__main__":
    key = jax.random.PRNGKey(0)
    params = init_params(key)
    packed = prepack_params(params)   # one-time repack, hoisted out of the call path

    # Same input as the original script: 400 points on [-2pi, 2pi], shape (N, 1).
    N = 400
    x = jnp.linspace(-2.0 * jnp.pi, 2.0 * jnp.pi, N, dtype=jnp.float32).reshape(N, 1)

    # tm=128 -> batch padded to 512, grid=(4,): >=2 steps per TensorCore on v7x,
    # no vreg pressure on any generation.
    out = mlp_forward(x, packed, tm=128)
    out = jax.block_until_ready(out)

    ref = reference_forward(x, params)
    assert out.shape == (N, 1)
    assert jnp.allclose(out, ref, atol=1e-5, rtol=1e-5), "mismatch vs JAX reference"

    print("KERNEL_OK")
</pallas_src>

<mosaic_0001>
module attributes {stable_mosaic.version = 11 : i64} {
  func.func @mlp_kernel(%arg0: i32, %arg1: memref<1x128xf32, #tpu.memory_space<vmem>>, %arg2: memref<296x128xf32, #tpu.memory_space<vmem>>, %arg3: memref<1x128xf32, #tpu.memory_space<vmem>>) attributes {dimension_semantics = [#tpu.dimension_semantics<parallel>], iteration_bounds = array<i64: 4>, scalar_prefetch = 0 : i64, scratch_operands = 0 : i64, tpu.core_type = #tpu.core_type<tc>, window_params = [{transform_indices = @transform_0, window_bounds = array<i64: 1, 128>}, {pipeline_mode = #tpu.pipeline_mode<synchronous>, transform_indices = @transform_1, window_bounds = array<i64: 296, 128>}, {transform_indices = @transform_2, window_bounds = array<i64: 1, 128>}]} {
    %c0 = arith.constant 0 : index
    %c0_0 = arith.constant 0 : index
    %0 = vector.load %arg1[%c0, %c0_0] : memref<1x128xf32, #tpu.memory_space<vmem>>, vector<1x128xf32>
    %c240 = arith.constant 240 : index
    %c0_1 = arith.constant 0 : index
    %1 = vector.load %arg2[%c240, %c0_1] : memref<296x128xf32, #tpu.memory_space<vmem>>, vector<10x1xf32>
    %c256 = arith.constant 256 : index
    %c0_2 = arith.constant 0 : index
    %2 = vector.load %arg2[%c256, %c0_2] : memref<296x128xf32, #tpu.memory_space<vmem>>, vector<10x1xf32>
    %3 = vector.broadcast %1 : vector<10x1xf32> to vector<10x128xf32>
    %4 = vector.broadcast %0 : vector<1x128xf32> to vector<10x128xf32>
    %5 = arith.mulf %3, %4 : vector<10x128xf32>
    %6 = vector.broadcast %2 : vector<10x1xf32> to vector<10x128xf32>
    %7 = arith.addf %5, %6 : vector<10x128xf32>
    %cst = arith.constant 0.000000e+00 : f32
    %8 = vector.broadcast %cst : f32 to vector<10x128xf32>
    %9 = arith.maximumf %7, %8 : vector<10x128xf32>
    %c0_3 = arith.constant 0 : index
    %c0_4 = arith.constant 0 : index
    %10 = vector.load %arg2[%c0_3, %c0_4] : memref<296x128xf32, #tpu.memory_space<vmem>>, vector<100x10xf32>
    %c104 = arith.constant 104 : index
    %c0_5 = arith.constant 0 : index
    %11 = vector.load %arg2[%c104, %c0_5] : memref<296x128xf32, #tpu.memory_space<vmem>>, vector<100x1xf32>
    %cst_6 = arith.constant dense<0.000000e+00> : vector<100x128xf32>
    %12 = tpu.matmul %10, %9, %cst_6 {dimension_numbers = #tpu.dot_dimension_numbers<[1], [0], [0], [1], [0, 0, 1, 1], [], []>, precision = #tpu.contract_precision<fp32>} : vector<100x10xf32>, vector<10x128xf32>, vector<100x128xf32> -> vector<100x128xf32>
    %13 = vector.broadcast %11 : vector<100x1xf32> to vector<100x128xf32>
    %14 = arith.addf %12, %13 : vector<100x128xf32>
    %cst_7 = arith.constant 0.000000e+00 : f32
    %15 = vector.broadcast %cst_7 : f32 to vector<100x128xf32>
    %16 = arith.maximumf %14, %15 : vector<100x128xf32>
    %c208 = arith.constant 208 : index
    %c0_8 = arith.constant 0 : index
    %17 = vector.load %arg2[%c208, %c0_8] : memref<296x128xf32, #tpu.memory_space<vmem>>, vector<10x100xf32>
    %c224 = arith.constant 224 : index
    %c0_9 = arith.constant 0 : index
    %18 = vector.load %arg2[%c224, %c0_9] : memref<296x128xf32, #tpu.memory_space<vmem>>, vector<10x1xf32>
    %cst_10 = arith.constant dense<0.000000e+00> : vector<10x128xf32>
    %19 = tpu.matmul %17, %16, %cst_10 {dimension_numbers = #tpu.dot_dimension_numbers<[1], [0], [0], [1], [0, 0, 1, 1], [], []>, precision = #tpu.contract_precision<fp32>} : vector<10x100xf32>, vector<100x128xf32>, vector<10x128xf32> -> vector<10x128xf32>
    %20 = vector.broadcast %18 : vector<10x1xf32> to vector<10x128xf32>
    %21 = arith.addf %19, %20 : vector<10x128xf32>
    %cst_11 = arith.constant 0.000000e+00 : f32
    %22 = vector.broadcast %cst_11 : f32 to vector<10x128xf32>
    %23 = arith.maximumf %21, %22 : vector<10x128xf32>
    %c272 = arith.constant 272 : index
    %c0_12 = arith.constant 0 : index
    %24 = vector.load %arg2[%c272, %c0_12] : memref<296x128xf32, #tpu.memory_space<vmem>>, vector<10x1xf32>
    %c288 = arith.constant 288 : index
    %c0_13 = arith.constant 0 : index
    %25 = vector.load %arg2[%c288, %c0_13] : memref<296x128xf32, #tpu.memory_space<vmem>>, vector<1x1xf32>
    %26 = vector.broadcast %24 : vector<10x1xf32> to vector<10x128xf32>
    %27 = arith.mulf %26, %23 : vector<10x128xf32>
    %cst_14 = arith.constant dense<0.000000e+00> : vector<128xf32>
    %28 = vector.multi_reduction <add>, %27, %cst_14 [0] : vector<10x128xf32> to vector<128xf32>
    %29 = vector.shape_cast %28 : vector<128xf32> to vector<1x128xf32>
    %30 = vector.broadcast %25 : vector<1x1xf32> to vector<1x128xf32>
    %31 = arith.addf %29, %30 : vector<1x128xf32>
    %c0_15 = arith.constant 0 : index
    %c0_16 = arith.constant 0 : index
    %32 = vector.load %arg3[%c0_15, %c0_16] : memref<1x128xf32, #tpu.memory_space<vmem>>, vector<1x128xf32>
    tpu.vector_store %arg3[%c0_15, %c0_16], %31 {strides = array<i32>} : memref<1x128xf32, #tpu.memory_space<vmem>>, vector<1x128xf32>,
    return
  }
  func.func @transform_0(%arg0: i32) -> (i32, i32) {
    %c0_i32 = arith.constant 0 : i32
    %c0_i32_0 = arith.constant 0 : i32
    return %c0_i32, %arg0 : i32, i32
  }
  func.func @transform_1(%arg0: i32) -> (i32, i32) {
    %c0_i32 = arith.constant 0 : i32
    %c0_i32_0 = arith.constant 0 : i32
    %c0_i32_1 = arith.constant 0 : i32
    return %c0_i32, %c0_i32_0 : i32, i32
  }
  func.func @transform_2(%arg0: i32) -> (i32, i32) {
    %c0_i32 = arith.constant 0 : i32
    %c0_i32_0 = arith.constant 0 : i32
    return %c0_i32, %arg0 : i32, i32
  }
}

</mosaic_0001>

<llo_original>
// kernel: mlp_forward.1
$region0: #{mlp_forward.1}
  #allocation0 [shape = 'u32[]', space=smem, size = 0x4, offset = 0x4, fixed_abs, tag = 'smem constant byte address 0x4 - core index']
  #allocation1 [shape = 'u32[144,128]{1,0:T(1,128)}', space=vmem, size = 0x12000, scoped, tag = 'internal scratch']
  %s0 = inlined_call_operand.vmem [shape: f32[1,512], index: 0, kind: input, shape index: {}]
  %s1 = inlined_call_operand.hbm [shape: f32[296,128], index: 1, kind: input, shape index: {}]
  %s2 = inlined_call_operand.vmem [shape: f32[1,512], index: 2, kind: output, shape index: {}]
  %s3 = sld [smem:[#allocation0]]
  $region45: #{mlp_forward.1} parent=0
    _
  %s5 = ssub.s32 1, %s3
  %s6 = scalar_select 0, %s5, %s3
  $region1: #{mlp_forward.1} parent=0
    #allocation2 [shape = 'u8[151552]{0}', space=vmem, size = 0x25000, scoped, tag = 'input window, operand 1, single buffered']
    #allocation3 [shape = 's32[2]{0}', space=sflag, size = 0x8, scoped, tag = 'scoped memory for mlp_forward.1']
    %7 = vsyncpa [#allocation3], 0
    loop: start=0, step=1, limit=6
    $region2: #{mlp_forward.1} parent=1 // loop_pre_header
      _
    $region3: #{mlp_forward.1} parent=1 // loop_header
      %s9 = sphi 0, %s13
      %p10 = scmp.ge.s32.totalorder %s9, 6
      %s19 = sphi 0, %s21
      %s22 = sphi 0, %s19
      %s23 = sphi 0, %s22
      %s39 = sphi 0, %s23
      %s43 = sphi 0, %s43
      %s45 = sphi 0, %s43
      %s46 = sphi 0, %s45
      %s60 = sphi 0, %s46
      %s66 = sphi 0, %s68
      %s69 = sphi 0, %s66
      %s70 = sphi 0, %s69
      %s86 = sphi 0, %s70
    $region4: #{mlp_forward.1} parent=1 // loop_header_branch
      %12 = sbr.rel (%p10) target = $region8
    $region5: #{mlp_forward.1} parent=1 // loop_body
      %s14 = ssub.s32 %s9, 1
      %s15 = ssub.s32 %s9, 2
      %s16 = sadd.s32 %s9, 1
      %s17 = ssub.s32 %s9, %s16
      %p18 = scmp.eq.s32.totalorder %s17, 0
      %s20 = sadd.s32 %s19, 1
      %s21 = scalar_select %p18, %s19, %s20
      %p24 = pneg %p18
      %p25 = scmp.eq.s32.totalorder %s9, 3
      %p26 = por %p24, %p25
      %p27 = scmp.ne.s32.totalorder %s19, %s22
      %p28 = scmp.eq.s32.totalorder %s9, 0
      %p29 = por %p27, %p28
      %p30 = scmp.ne.s32.totalorder %s19, %s22
      %p31 = scmp.eq.s32.totalorder %s14, 3
      %p32 = por %p30, %p31
      %p33 = scmp.ne.s32.totalorder %s22, %s23
      %p34 = scmp.eq.s32.totalorder %s14, 0
      %p35 = por %p33, %p34
      %p36 = scmp.ne.s32.totalorder %s22, %s23
      %p37 = scmp.eq.s32.totalorder %s15, 3
      %p38 = por %p36, %p37
      %p40 = scmp.ne.s32.totalorder %s23, %s39
      %p41 = scmp.eq.s32.totalorder %s15, 0
      %p42 = por %p40, %p41
      %s44 = sadd.s32 %s43, 1
      %p47 = scmp.eq.s32.totalorder %s9, 3
      %p48 = scmp.ne.s32.totalorder %s43, %s45
      %p49 = scmp.eq.s32.totalorder %s9, 0
      %p50 = por %p48, %p49
      %p51 = scmp.ne.s32.totalorder %s43, %s45
      %p52 = scmp.eq.s32.totalorder %s14, 3
      %p53 = por %p51, %p52
      %p54 = scmp.ne.s32.totalorder %s45, %s46
      %p55 = scmp.eq.s32.totalorder %s14, 0
      %p56 = por %p54, %p55
      %p57 = scmp.ne.s32.totalorder %s45, %s46
      %p58 = scmp.eq.s32.totalorder %s15, 3
      %p59 = por %p57, %p58
      %p61 = scmp.ne.s32.totalorder %s46, %s60
      %p62 = scmp.eq.s32.totalorder %s15, 0
      %p63 = por %p61, %p62
      %s64 = ssub.s32 %s9, %s16
      %p65 = scmp.eq.s32.totalorder %s64, 0
      %s67 = sadd.s32 %s66, 1
      %s68 = scalar_select %p65, %s66, %s67
      %p71 = pneg %p65
      %p72 = scmp.eq.s32.totalorder %s9, 3
      %p73 = por %p71, %p72
      %p74 = scmp.ne.s32.totalorder %s66, %s69
      %p75 = scmp.eq.s32.totalorder %s9, 0
      %p76 = por %p74, %p75
      %p77 = scmp.ne.s32.totalorder %s66, %s69
      %p78 = scmp.eq.s32.totalorder %s14, 3
      %p79 = por %p77, %p78
      %p80 = scmp.ne.s32.totalorder %s69, %s70
      %p81 = scmp.eq.s32.totalorder %s14, 0
      %p82 = por %p80, %p81
      %p83 = scmp.ne.s32.totalorder %s69, %s70
      %p84 = scmp.eq.s32.totalorder %s15, 3
      %p85 = por %p83, %p84
      %p87 = scmp.ne.s32.totalorder %s70, %s86
      %p88 = scmp.eq.s32.totalorder %s15, 0
      %p89 = por %p87, %p88
      %p90 = scmp.le.s32.totalorder 1, %s9
      %p91 = scmp.lt.s32.totalorder %s9, 5
      %p92 = pnand %p90, %p91
      %p93 = pneg %p92
      // Predicated region
      $region9: #{mlp_forward.1} parent=5 // pred_check
        _
      $region10: #{mlp_forward.1} parent=5 // pred_check_branch
        %95 = sbr.rel (%p92) target = $region12
      $region11: #{mlp_forward.1} parent=5 // pred_region
        %s96 = ssub.s32 %s9, 1
        // Predicated region
        $region13: #{mlp_forward.1} parent=11 // pred_check
          %p97 = pneg %p56
        $region14: #{mlp_forward.1} parent=11 // pred_check_branch
          %99 = sbr.rel (%p97) target = $region16
        $region15: #{mlp_forward.1} parent=11 // pred_region
          %s101 = ssub.s32 4736, 4736
          %102 = vsyncadd [#allocation3], %s101
          %s103 = sshll.u32 [#allocation2], 4
          %s104 = int_to_ptr.vmem [resolvable:$true] %s103
          %109 = dma.hbm_to_vmem [thread:$0]  %s1, 4736, %s104, [#allocation3], 128, 128, 8
        $region16: #{mlp_forward.1} parent=11 // pred_fallthru
          _
      $region12: #{mlp_forward.1} parent=5 // pred_fallthru
        _
      %p110 = scmp.lt.s32.totalorder %s9, 4
      // Predicated region
      $region17: #{mlp_forward.1} parent=5 // pred_check
        %p111 = pneg %p110
      $region18: #{mlp_forward.1} parent=5 // pred_check_branch
        %113 = sbr.rel (%p111) target = $region20
      $region19: #{mlp_forward.1} parent=5 // pred_region
        // Predicated region
        $region21: #{mlp_forward.1} parent=19 // pred_check
          %p114 = pneg %p29
        $region22: #{mlp_forward.1} parent=19 // pred_check_branch
          %116 = sbr.rel (%p114) target = $region24
        $region23: #{mlp_forward.1} parent=19 // pred_region
          %p117 = scmp.lt.s32.totalorder %s9, 3
          %s118 = scalar_select %p117, %s9, 3
          %s119 = scalar_lea.vmem %s0, %s118
        $region24: #{mlp_forward.1} parent=19 // pred_fallthru
          _
      $region20: #{mlp_forward.1} parent=5 // pred_fallthru
        _
      %p120 = scmp.le.s32.totalorder 1, %s9
      %p121 = scmp.lt.s32.totalorder %s9, 5
      %p122 = pnand %p120, %p121
      %p123 = pneg %p122
      // Predicated region
      $region25: #{mlp_forward.1} parent=5 // pred_check
        _
      $region26: #{mlp_forward.1} parent=5 // pred_check_branch
        %125 = sbr.rel (%p122) target = $region28
      $region27: #{mlp_forward.1} parent=5 // pred_region
        %s126 = ssub.s32 %s9, 1
        // Predicated region
        $region29: #{mlp_forward.1} parent=27 // pred_check
          %p127 = pneg %p56
        $region30: #{mlp_forward.1} parent=27 // pred_check_branch
          %129 = sbr.rel (%p127) target = $region32
        $region31: #{mlp_forward.1} parent=27 // pred_region
          %130 = dma.done [#allocation3], 4736
        $region32: #{mlp_forward.1} parent=27 // pred_fallthru
          _
        %p131 = scmp.lt.s32.totalorder %s14, 3
        %s132 = scalar_select %p131, %s14, 3
        %s133 = scalar_lea.vmem %s0, %s132
        %p134 = pneg %p35
        %p135 = pneg %p32
        %p136 = pneg %p56
        %p137 = pneg %p53
        %p138 = pneg %p82
        %p139 = pneg %p79
        %p140 = scmp.lt.s32.totalorder %s14, 3
        %s141 = scalar_select %p140, %s14, 3
        %s142 = scalar_lea.vmem %s2, %s141
        %p143 = scmp.lt.s32.totalorder %s14, 3
        %s144 = scalar_select %p143, %s14, 3
        %s145 = scalar_lea.vmem %s0, %s144
        %p146 = scmp.lt.s32.totalorder %s14, 3
        %s147 = scalar_select %p146, %s14, 3
        %s148 = scalar_lea.vmem %s2, %s147
        %v149 = vld [vmem:[%s145] sm:$0x1]
        %v150 = vld [vmem:[#allocation2 + $0xf0] sm:$0xff]
        %v151 = vld [vmem:[#allocation2 + $0xf8] sm:$0x3]
        %v152 = vld [vmem:[#allocation2 + $0x100] sm:$0xff]
        %v153 = vld [vmem:[#allocation2 + $0x108] sm:$0x3]
        %155 = vset.pattern.permute.xlu0 0
        %156 = vperm.xlu0 %155, %v150
        %v157 = vpop.permute.xlu0 %156
        %160 = vset.pattern.permute.xlu0 0
        %161 = vperm.xlu0 %160, %v151
        %v162 = vpop.permute.xlu0 %161
        %v165 = vlaneseq
        %v166 = vshrl.u32 %v165, 7
        %v167 = vsub.s32 0, %v166
        %v168 = vrot.slane %v149, %v167
        %v170 = vmul.f32 %v157, %v168
        %v171 = vmul.f32 %v162, %v168
        %173 = vset.pattern.permute.xlu0 0
        %174 = vperm.xlu0 %173, %v152
        %v175 = vpop.permute.xlu0 %174
        %178 = vset.pattern.permute.xlu0 0
        %179 = vperm.xlu0 %178, %v153
        %v180 = vpop.permute.xlu0 %179
        %v182 = vadd.f32 %v170, %v175
        %v183 = vadd.f32 %v171, %v180
        %v184 = vmax.f32 %v182, 0.0
        %v185 = vmax.f32 %v183, 0.0
        %v186 = vld [vmem:[#allocation2] sm:$0xff]
        %v187 = vld [vmem:[#allocation2 + $0x8] sm:$0xff]
        %v188 = vld [vmem:[#allocation2 + $0x10] sm:$0xff]
        %v189 = vld [vmem:[#allocation2 + $0x18] sm:$0xff]
        %v190 = vld [vmem:[#allocation2 + $0x20] sm:$0xff]
        %v191 = vld [vmem:[#allocation2 + $0x28] sm:$0xff]
        %v192 = vld [vmem:[#allocation2 + $0x30] sm:$0xff]
        %v193 = vld [vmem:[#allocation2 + $0x38] sm:$0xff]
        %v194 = vld [vmem:[#allocation2 + $0x40] sm:$0xff]
        %v195 = vld [vmem:[#allocation2 + $0x48] sm:$0xff]
        %v196 = vld [vmem:[#allocation2 + $0x50] sm:$0xff]
        %v197 = vld [vmem:[#allocation2 + $0x58] sm:$0xff]
        %v198 = vld [vmem:[#allocation2 + $0x60] sm:$0xf]
        %v199 = vld [vmem:[#allocation2 + $0x68] sm:$0xff]
        %v200 = vld [vmem:[#allocation2 + $0x70] sm:$0xff]
        %v201 = vld [vmem:[#allocation2 + $0x78] sm:$0xff]
        %v202 = vld [vmem:[#allocation2 + $0x80] sm:$0xff]
        %v203 = vld [vmem:[#allocation2 + $0x88] sm:$0xff]
        %v204 = vld [vmem:[#allocation2 + $0x90] sm:$0xff]
        %v205 = vld [vmem:[#allocation2 + $0x98] sm:$0xff]
        %v206 = vld [vmem:[#allocation2 + $0xa0] sm:$0xff]
        %v207 = vld [vmem:[#allocation2 + $0xa8] sm:$0xff]
        %v208 = vld [vmem:[#allocation2 + $0xb0] sm:$0xff]
        %v209 = vld [vmem:[#allocation2 + $0xb8] sm:$0xff]
        %v210 = vld [vmem:[#allocation2 + $0xc0] sm:$0xff]
        %v211 = vld [vmem:[#allocation2 + $0xc8] sm:$0xf]
        %213 = vset.pattern.permute.xlu0 0
        %214 = vperm.xlu0 %213, %v199
        %v215 = vpop.permute.xlu0 %214
        %218 = vset.pattern.permute.xlu0 0
        %219 = vperm.xlu0 %218, %v200
        %v220 = vpop.permute.xlu0 %219
        %223 = vset.pattern.permute.xlu0 0
        %224 = vperm.xlu0 %223, %v201
        %v225 = vpop.permute.xlu0 %224
        %228 = vset.pattern.permute.xlu0 0
        %229 = vperm.xlu0 %228, %v202
        %v230 = vpop.permute.xlu0 %229
        %233 = vset.pattern.permute.xlu0 0
        %234 = vperm.xlu0 %233, %v203
        %v235 = vpop.permute.xlu0 %234
        %238 = vset.pattern.permute.xlu0 0
        %239 = vperm.xlu0 %238, %v204
        %v240 = vpop.permute.xlu0 %239
        %243 = vset.pattern.permute.xlu0 0
        %244 = vperm.xlu0 %243, %v205
        %v245 = vpop.permute.xlu0 %244
        %248 = vset.pattern.permute.xlu0 0
        %249 = vperm.xlu0 %248, %v206
        %v250 = vpop.permute.xlu0 %249
        %253 = vset.pattern.permute.xlu0 0
        %254 = vperm.xlu0 %253, %v207
        %v255 = vpop.permute.xlu0 %254
        %258 = vset.pattern.permute.xlu0 0
        %259 = vperm.xlu0 %258, %v208
        %v260 = vpop.permute.xlu0 %259
        %263 = vset.pattern.permute.xlu0 0
        %264 = vperm.xlu0 %263, %v209
        %v265 = vpop.permute.xlu0 %264
        %268 = vset.pattern.permute.xlu0 0
        %269 = vperm.xlu0 %268, %v210
        %v270 = vpop.permute.xlu0 %269
        %273 = vset.pattern.permute.xlu0 0
        %274 = vperm.xlu0 %273, %v211
        %v275 = vpop.permute.xlu0 %274
        %vm277 = vcmask 80896
        %v279 = vsel %vm277, %v186, 0
        %v282 = vsel %vm277, %v187, 0
        %v285 = vsel %vm277, %v188, 0
        %v288 = vsel %vm277, %v189, 0
        %v291 = vsel %vm277, %v190, 0
        %v294 = vsel %vm277, %v191, 0
        %v297 = vsel %vm277, %v192, 0
        %v300 = vsel %vm277, %v193, 0
        %v303 = vsel %vm277, %v194, 0
        %v306 = vsel %vm277, %v195, 0
        %v309 = vsel %vm277, %v196, 0
        %v312 = vsel %vm277, %v197, 0
        %v315 = vsel %vm277, %v198, 0
        %vm317 = vcmask 1041408
        %v319 = vsel %vm317, %v185, 0
        %321 = vmatprep.subr.mxu0 0.0
        %v322 = vand.u32 %v184, 4294901760
        %323 = vmatpush1.msra.mxu0 %v322
        %324 = vmatprep.subr.mxu0 0.0
        %v325 = vand.u32 %v319, 4294901760
        %326 = vmatpush1.msra.mxu0 %v325
        %327 = vmatprep.subr.mxu0 0.0
        %328 = vmatpush1.msra.mxu0 0.0
        %329 = vmatprep.subr.mxu0 0.0
        %330 = vmatpush1.msra.mxu0 0.0
        %331 = vmatprep.subr.mxu0 0.0
        %332 = vmatpush1.msra.mxu0 0.0
        %333 = vmatprep.subr.mxu0 0.0
        %334 = vmatpush1.msra.mxu0 0.0
        %335 = vmatprep.subr.mxu0 0.0
        %336 = vmatpush1.msra.mxu0 0.0
        %337 = vmatprep.subr.mxu0 0.0
        %338 = vmatpush1.msra.mxu0 0.0
        %339 = vmatprep.subr.mxu0 0.0
        %340 = vmatpush1.msra.mxu0 0.0
        %341 = vmatprep.subr.mxu0 0.0
        %342 = vmatpush1.msra.mxu0 0.0
        %343 = vmatprep.subr.mxu0 0.0
        %344 = vmatpush1.msra.mxu0 0.0
        %345 = vmatprep.subr.mxu0 0.0
        %346 = vmatpush1.msra.mxu0 0.0
        %347 = vmatprep.subr.mxu0 0.0
        %348 = vmatpush1.msra.mxu0 0.0
        %349 = vmatprep.subr.mxu0 0.0
        %350 = vmatpush1.msra.mxu0 0.0
        %351 = vmatprep.subr.mxu0 0.0
        %352 = vmatpush1.msra.mxu0 0.0
        %353 = vmatprep.subr.mxu0 0.0
        %354 = vmatpush1.msra.mxu0 0.0
        %355 = vmatprep.subr.mxu0 0.0
        %356 = vmatpush1.msra.mxu0 0.0
        %357 = vmatprep.subr.mxu0 0.0
        %358 = vmatpush1.msra.mxu0 0.0
        %359 = vmatprep.subr.mxu0 0.0
        %360 = vmatpush1.msra.mxu0 0.0
        %361 = vmatprep.subr.mxu0 0.0
        %362 = vmatpush1.msra.mxu0 0.0
        %363 = vmatprep.subr.mxu0 0.0
        %364 = vmatpush1.msra.mxu0 0.0
        %365 = vmatprep.subr.mxu0 0.0
        %366 = vmatpush1.msra.mxu0 0.0
        %367 = vmatprep.subr.mxu0 0.0
        %368 = vmatpush1.msra.mxu0 0.0
        %369 = vmatprep.subr.mxu0 0.0
        %370 = vmatpush1.msra.mxu0 0.0
        %371 = vmatprep.subr.mxu0 0.0
        %372 = vmatpush1.msra.mxu0 0.0
        %373 = vmatprep.subr.mxu0 0.0
        %374 = vmatpush1.msra.mxu0 0.0
        %375 = vmatprep.subr.mxu0 0.0
        %376 = vmatpush1.msra.mxu0 0.0
        %377 = vmatprep.subr.mxu0 0.0
        %378 = vmatpush1.msra.mxu0 0.0
        %379 = vmatprep.subr.mxu0 0.0
        %380 = vmatpush1.msra.mxu0 0.0
        %381 = vmatprep.subr.mxu0 0.0
        %382 = vmatpush1.msra.mxu0 0.0
        %383 = vmatprep.subr.mxu0 0.0
        %384 = vmatpush1.msra.mxu0 0.0
        %385 = vmatprep.subr.mxu0 0.0
        %386 = vmatpush1.msra.mxu0 0.0
        %387 = vmatprep.mubr.f32.mxu0 0.0
        %v388 = vand.u32 %v279, 4294901760
        %v389 = vsub.f32 %v279, %v388
        %v390 = vand.u32 %v389, 4294901760
        %v391 = vsub.f32 %v389, %v390
        %v392 = vand.u32 %v391, 4294901760
        %393 = vmatmul.mubr.f32.gmra.mrb[0].mxu0 %v392
        %v394 = vpop.f32.mrb[0].mxu0
        %v395 = vadd.f32 %v215, %v394
        %v396 = vpop.f32.mrb[0].mxu0
        %397 = vmatprep.mubr.f32.mxu0 0.0
        %v398 = vand.u32 %v282, 4294901760
        %v399 = vsub.f32 %v282, %v398
        %v400 = vand.u32 %v399, 4294901760
        %v401 = vsub.f32 %v399, %v400
        %v402 = vand.u32 %v401, 4294901760
        %403 = vmatmul.mubr.f32.gmra.mrb[0].mxu0 %v402
        %v404 = vpop.f32.mrb[0].mxu0
        %v405 = vadd.f32 %v220, %v404
        %v406 = vpop.f32.mrb[0].mxu0
        %407 = vmatprep.mubr.f32.mxu0 0.0
        %v408 = vand.u32 %v285, 4294901760
        %v409 = vsub.f32 %v285, %v408
        %v410 = vand.u32 %v409, 4294901760
        %v411 = vsub.f32 %v409, %v410
        %v412 = vand.u32 %v411, 4294901760
        %413 = vmatmul.mubr.f32.gmra.mrb[0].mxu0 %v412
        %v414 = vpop.f32.mrb[0].mxu0
        %v415 = vadd.f32 %v225, %v414
        %v416 = vpop.f32.mrb[0].mxu0
        %417 = vmatprep.mubr.f32.mxu0 0.0
        %v418 = vand.u32 %v288, 4294901760
        %v419 = vsub.f32 %v288, %v418
        %v420 = vand.u32 %v419, 4294901760
        %v421 = vsub.f32 %v419, %v420
        %v422 = vand.u32 %v421, 4294901760
        %423 = vmatmul.mubr.f32.gmra.mrb[0].mxu0 %v422
        %v424 = vpop.f32.mrb[0].mxu0
        %v425 = vadd.f32 %v230, %v424
        %v426 = vpop.f32.mrb[0].mxu0
        %427 = vmatprep.mubr.f32.mxu0 0.0
        %v428 = vand.u32 %v291, 4294901760
        %v429 = vsub.f32 %v291, %v428
        %v430 = vand.u32 %v429, 4294901760
        %v431 = vsub.f32 %v429, %v430
        %v432 = vand.u32 %v431, 4294901760
        %433 = vmatmul.mubr.f32.gmra.mrb[0].mxu0 %v432
        %v434 = vpop.f32.mrb[0].mxu0
        %v435 = vadd.f32 %v235, %v434
        %v436 = vpop.f32.mrb[0].mxu0
        %437 = vmatprep.mubr.f32.mxu0 0.0
        %v438 = vand.u32 %v294, 4294901760
        %v439 = vsub.f32 %v294, %v438
        %v440 = vand.u32 %v439, 4294901760
        %v441 = vsub.f32 %v439, %v440
        %v442 = vand.u32 %v441, 4294901760
        %443 = vmatmul.mubr.f32.gmra.mrb[0].mxu0 %v442
        %v444 = vpop.f32.mrb[0].mxu0
        %v445 = vadd.f32 %v240, %v444
        %v446 = vpop.f32.mrb[0].mxu0
        %447 = vmatprep.mubr.f32.mxu0 0.0
        %v448 = vand.u32 %v297, 4294901760
        %v449 = vsub.f32 %v297, %v448
        %v450 = vand.u32 %v449, 4294901760
        %v451 = vsub.f32 %v449, %v450
        %v452 = vand.u32 %v451, 4294901760
        %453 = vmatmul.mubr.f32.gmra.mrb[0].mxu0 %v452
        %v454 = vpop.f32.mrb[0].mxu0
        %v455 = vadd.f32 %v245, %v454
        %v456 = vpop.f32.mrb[0].mxu0
        %457 = vmatprep.mubr.f32.mxu0 0.0
        %v458 = vand.u32 %v300, 4294901760
        %v459 = vsub.f32 %v300, %v458
        %v460 = vand.u32 %v459, 4294901760
        %v461 = vsub.f32 %v459, %v460
        %v462 = vand.u32 %v461, 4294901760
        %463 = vmatmul.mubr.f32.gmra.mrb[0].mxu0 %v462
        %v464 = vpop.f32.mrb[0].mxu0
        %v465 = vadd.f32 %v250, %v464
        %v466 = vpop.f32.mrb[0].mxu0
        %467 = vmatprep.mubr.f32.mxu0 0.0
        %v468 = vand.u32 %v303, 4294901760
        %v469 = vsub.f32 %v303, %v468
        %v470 = vand.u32 %v469, 4294901760
        %v471 = vsub.f32 %v469, %v470
        %v472 = vand.u32 %v471, 4294901760
        %473 = vmatmul.mubr.f32.gmra.mrb[0].mxu0 %v472
        %v474 = vpop.f32.mrb[0].mxu0
        %v475 = vadd.f32 %v255, %v474
        %v476 = vpop.f32.mrb[0].mxu0
        %477 = vmatprep.mubr.f32.mxu0 0.0
        %v478 = vand.u32 %v306, 4294901760
        %v479 = vsub.f32 %v306, %v478
        %v480 = vand.u32 %v479, 4294901760
        %v481 = vsub.f32 %v479, %v480
        %v482 = vand.u32 %v481, 4294901760
        %483 = vmatmul.mubr.f32.gmra.mrb[0].mxu0 %v482
        %v484 = vpop.f32.mrb[0].mxu0
        %v485 = vadd.f32 %v260, %v484
        %v486 = vpop.f32.mrb[0].mxu0
        %487 = vmatprep.mubr.f32.mxu0 0.0
        %v488 = vand.u32 %v309, 4294901760
        %v489 = vsub.f32 %v309, %v488
        %v490 = vand.u32 %v489, 4294901760
        %v491 = vsub.f32 %v489, %v490
        %v492 = vand.u32 %v491, 4294901760
        %493 = vmatmul.mubr.f32.gmra.mrb[0].mxu0 %v492
        %v494 = vpop.f32.mrb[0].mxu0
        %v495 = vadd.f32 %v265, %v494
        %v496 = vpop.f32.mrb[0].mxu0
        %497 = vmatprep.mubr.f32.mxu0 0.0
        %v498 = vand.u32 %v312, 4294901760
        %v499 = vsub.f32 %v312, %v498
        %v500 = vand.u32 %v499, 4294901760
        %v501 = vsub.f32 %v499, %v500
        %v502 = vand.u32 %v501, 4294901760
        %503 = vmatmul.mubr.f32.gmra.mrb[0].mxu0 %v502
        %v504 = vpop.f32.mrb[0].mxu0
        %v505 = vadd.f32 %v270, %v504
        %v506 = vpop.f32.mrb[0].mxu0
        %507 = vmatprep.mubr.f32.mxu0 0.0
        %v508 = vand.u32 %v315, 4294901760
        %v509 = vsub.f32 %v315, %v508
        %v510 = vand.u32 %v509, 4294901760
        %v511 = vsub.f32 %v509, %v510
        %v512 = vand.u32 %v511, 4294901760
        %513 = vmatmul.mubr.f32.gmra.mrb[0].mxu0 %v512
        %v514 = vpop.f32.mrb[0].mxu0
        %v515 = vadd.f32 %v275, %v514
        %v516 = vpop.f32.mrb[0].mxu0
        %517 = vdwg.mxu0
        %518 = vmatprep.subr.mxu0 0.0
        %v519 = vand.u32 %v184, 4294901760
        %v520 = vsub.f32 %v184, %v519
        %v521 = vand.u32 %v520, 4294901760
        %v522 = vsub.f32 %v520, %v521
        %v523 = vand.u32 %v522, 4294901760
        %524 = vmatpush1.msra.mxu0 %v523
        %525 = vmatprep.subr.mxu0 0.0
        %v526 = vand.u32 %v319, 4294901760
        %v527 = vsub.f32 %v319, %v526
        %v528 = vand.u32 %v527, 4294901760
        %v529 = vsub.f32 %v527, %v528
        %v530 = vand.u32 %v529, 4294901760
        %531 = vmatpush1.msra.mxu0 %v530
        %532 = vmatprep.subr.mxu0 0.0
        %533 = vmatpush1.msra.mxu0 0.0
        %534 = vmatprep.subr.mxu0 0.0
        %535 = vmatpush1.msra.mxu0 0.0
        %536 = vmatprep.subr.mxu0 0.0
        %537 = vmatpush1.msra.mxu0 0.0
        %538 = vmatprep.subr.mxu0 0.0
        %539 = vmatpush1.msra.mxu0 0.0
        %540 = vmatprep.subr.mxu0 0.0
        %541 = vmatpush1.msra.mxu0 0.0
        %542 = vmatprep.subr.mxu0 0.0
        %543 = vmatpush1.msra.mxu0 0.0
        %544 = vmatprep.subr.mxu0 0.0
        %545 = vmatpush1.msra.mxu0 0.0
        %546 = vmatprep.subr.mxu0 0.0
        %547 = vmatpush1.msra.mxu0 0.0
        %548 = vmatprep.subr.mxu0 0.0
        %549 = vmatpush1.msra.mxu0 0.0
        %550 = vmatprep.subr.mxu0 0.0
        %551 = vmatpush1.msra.mxu0 0.0
        %552 = vmatprep.subr.mxu0 0.0
        %553 = vmatpush1.msra.mxu0 0.0
        %554 = vmatprep.subr.mxu0 0.0
        %555 = vmatpush1.msra.mxu0 0.0
        %556 = vmatprep.subr.mxu0 0.0
        %557 = vmatpush1.msra.mxu0 0.0
        %558 = vmatprep.subr.mxu0 0.0
        %559 = vmatpush1.msra.mxu0 0.0
        %560 = vmatprep.subr.mxu0 0.0
        %561 = vmatpush1.msra.mxu0 0.0
        %562 = vmatprep.subr.mxu0 0.0
        %563 = vmatpush1.msra.mxu0 0.0
        %564 = vmatprep.subr.mxu0 0.0
        %565 = vmatpush1.msra.mxu0 0.0
        %566 = vmatprep.subr.mxu0 0.0
        %567 = vmatpush1.msra.mxu0 0.0
        %568 = vmatprep.subr.mxu0 0.0
        %569 = vmatpush1.msra.mxu0 0.0
        %570 = vmatprep.subr.mxu0 0.0
        %571 = vmatpush1.msra.mxu0 0.0
        %572 = vmatprep.subr.mxu0 0.0
        %573 = vmatpush1.msra.mxu0 0.0
        %574 = vmatprep.subr.mxu0 0.0
        %575 = vmatpush1.msra.mxu0 0.0
        %576 = vmatprep.subr.mxu0 0.0
        %577 = vmatpush1.msra.mxu0 0.0
        %578 = vmatprep.subr.mxu0 0.0
        %579 = vmatpush1.msra.mxu0 0.0
        %580 = vmatprep.subr.mxu0 0.0
        %581 = vmatpush1.msra.mxu0 0.0
        %582 = vmatprep.subr.mxu0 0.0
        %583 = vmatpush1.msra.mxu0 0.0
        %584 = vmatprep.subr.mxu0 0.0
        %585 = vmatpush1.msra.mxu0 0.0
        %586 = vmatprep.subr.mxu0 0.0
        %587 = vmatpush1.msra.mxu0 0.0
        %588 = vmatprep.subr.mxu0 0.0
        %589 = vmatpush1.msra.mxu0 0.0
        %590 = vmatprep.subr.mxu0 0.0
        %591 = vmatpush1.msra.mxu0 0.0
        %592 = vmatprep.mubr.f32.mxu0 0.0
        %v593 = vand.u32 %v279, 4294901760
        %594 = vmatmul.mubr.f32.gmra.mrb[0].mxu0 %v593
        %v595 = vpop.f32.mrb[0].mxu0
        %v596 = vadd.f32 %v395, %v595
        %v597 = vpop.f32.mrb[0].mxu0
        %598 = vmatprep.mubr.f32.mxu0 0.0
        %v599 = vand.u32 %v282, 4294901760
        %600 = vmatmul.mubr.f32.gmra.mrb[0].mxu0 %v599
        %v601 = vpop.f32.mrb[0].mxu0
        %v602 = vadd.f32 %v405, %v601
        %v603 = vpop.f32.mrb[0].mxu0
        %604 = vmatprep.mubr.f32.mxu0 0.0
        %v605 = vand.u32 %v285, 4294901760
        %606 = vmatmul.mubr.f32.gmra.mrb[0].mxu0 %v605
        %v607 = vpop.f32.mrb[0].mxu0
        %v608 = vadd.f32 %v415, %v607
        %v609 = vpop.f32.mrb[0].mxu0
        %610 = vmatprep.mubr.f32.mxu0 0.0
        %v611 = vand.u32 %v288, 4294901760
        %612 = vmatmul.mubr.f32.gmra.mrb[0].mxu0 %v611
        %v613 = vpop.f32.mrb[0].mxu0
        %v614 = vadd.f32 %v425, %v613
        %v615 = vpop.f32.mrb[0].mxu0
        %616 = vmatprep.mubr.f32.mxu0 0.0
        %v617 = vand.u32 %v291, 4294901760
        %618 = vmatmul.mubr.f32.gmra.mrb[0].mxu0 %v617
        %v619 = vpop.f32.mrb[0].mxu0
        %v620 = vadd.f32 %v435, %v619
        %v621 = vpop.f32.mrb[0].mxu0
        %622 = vmatprep.mubr.f32.mxu0 0.0
        %v623 = vand.u32 %v294, 4294901760
        %624 = vmatmul.mubr.f32.gmra.mrb[0].mxu0 %v623
        %v625 = vpop.f32.mrb[0].mxu0
        %v626 = vadd.f32 %v445, %v625
        %v627 = vpop.f32.mrb[0].mxu0
        %628 = vmatprep.mubr.f32.mxu0 0.0
        %v629 = vand.u32 %v297, 4294901760
        %630 = vmatmul.mubr.f32.gmra.mrb[0].mxu0 %v629
        %v631 = vpop.f32.mrb[0].mxu0
        %v632 = vadd.f32 %v455, %v631
        %v633 = vpop.f32.mrb[0].mxu0
        %634 = vmatprep.mubr.f32.mxu0 0.0
        %v635 = vand.u32 %v300, 4294901760
        %636 = vmatmul.mubr.f32.gmra.mrb[0].mxu0 %v635
        %v637 = vpop.f32.mrb[0].mxu0
        %v638 = vadd.f32 %v465, %v637
        %v639 = vpop.f32.mrb[0].mxu0
        %640 = vmatprep.mubr.f32.mxu0 0.0
        %v641 = vand.u32 %v303, 4294901760
        %642 = vmatmul.mubr.f32.gmra.mrb[0].mxu0 %v641
        %v643 = vpop.f32.mrb[0].mxu0
        %v644 = vadd.f32 %v475, %v643
        %v645 = vpop.f32.mrb[0].mxu0
        %646 = vmatprep.mubr.f32.mxu0 0.0
        %v647 = vand.u32 %v306, 4294901760
        %648 = vmatmul.mubr.f32.gmra.mrb[0].mxu0 %v647
        %v649 = vpop.f32.mrb[0].mxu0
        %v650 = vadd.f32 %v485, %v649
        %v651 = vpop.f32.mrb[0].mxu0
        %652 = vmatprep.mubr.f32.mxu0 0.0
        %v653 = vand.u32 %v309, 4294901760
        %654 = vmatmul.mubr.f32.gmra.mrb[0].mxu0 %v653
        %v655 = vpop.f32.mrb[0].mxu0
        %v656 = vadd.f32 %v495, %v655
        %v657 = vpop.f32.mrb[0].mxu0
        %658 = vmatprep.mubr.f32.mxu0 0.0
        %v659 = vand.u32 %v312, 4294901760
        %660 = vmatmul.mubr.f32.gmra.mrb[0].mxu0 %v659
        %v661 = vpop.f32.mrb[0].mxu0
        %v662 = vadd.f32 %v505, %v661
        %v663 = vpop.f32.mrb[0].mxu0
        %664 = vmatprep.mubr.f32.mxu0 0.0
        %v665 = vand.u32 %v315, 4294901760
        %666 = vmatmul.mubr.f32.gmra.mrb[0].mxu0 %v665
        %v667 = vpop.f32.mrb[0].mxu0
        %v668 = vadd.f32 %v515, %v667
        %v669 = vpop.f32.mrb[0].mxu0
        %670 = vdwg.mxu0
        %671 = vmatprep.subr.mxu0 0.0
        %v672 = vand.u32 %v184, 4294901760
        %v673 = vsub.f32 %v184, %v672
        %674 = vmatpush1.msra.mxu0 %v673
        %675 = vmatprep.subr.mxu0 0.0
        %v676 = vand.u32 %v319, 4294901760
        %v677 = vsub.f32 %v319, %v676
        %678 = vmatpush1.msra.mxu0 %v677
        %679 = vmatprep.subr.mxu0 0.0
        %680 = vmatpush1.msra.mxu0 0.0
        %681 = vmatprep.subr.mxu0 0.0
        %682 = vmatpush1.msra.mxu0 0.0
        %683 = vmatprep.subr.mxu0 0.0
        %684 = vmatpush1.msra.mxu0 0.0
        %685 = vmatprep.subr.mxu0 0.0
        %686 = vmatpush1.msra.mxu0 0.0
        %687 = vmatprep.subr.mxu0 0.0
        %688 = vmatpush1.msra.mxu0 0.0
        %689 = vmatprep.subr.mxu0 0.0
        %690 = vmatpush1.msra.mxu0 0.0
        %691 = vmatprep.subr.mxu0 0.0
        %692 = vmatpush1.msra.mxu0 0.0
        %693 = vmatprep.subr.mxu0 0.0
        %694 = vmatpush1.msra.mxu0 0.0
        %695 = vmatprep.subr.mxu0 0.0
        %696 = vmatpush1.msra.mxu0 0.0
        %697 = vmatprep.subr.mxu0 0.0
        %698 = vmatpush1.msra.mxu0 0.0
        %699 = vmatprep.subr.mxu0 0.0
        %700 = vmatpush1.msra.mxu0 0.0
        %701 = vmatprep.subr.mxu0 0.0
        %702 = vmatpush1.msra.mxu0 0.0
        %703 = vmatprep.subr.mxu0 0.0
        %704 = vmatpush1.msra.mxu0 0.0
        %705 = vmatprep.subr.mxu0 0.0
        %706 = vmatpush1.msra.mxu0 0.0
        %707 = vmatprep.subr.mxu0 0.0
        %708 = vmatpush1.msra.mxu0 0.0
        %709 = vmatprep.subr.mxu0 0.0
        %710 = vmatpush1.msra.mxu0 0.0
        %711 = vmatprep.subr.mxu0 0.0
        %712 = vmatpush1.msra.mxu0 0.0
        %713 = vmatprep.subr.mxu0 0.0
        %714 = vmatpush1.msra.mxu0 0.0
        %715 = vmatprep.subr.mxu0 0.0
        %716 = vmatpush1.msra.mxu0 0.0
        %717 = vmatprep.subr.mxu0 0.0
        %718 = vmatpush1.msra.mxu0 0.0
        %719 = vmatprep.subr.mxu0 0.0
        %720 = vmatpush1.msra.mxu0 0.0
        %721 = vmatprep.subr.mxu0 0.0
        %722 = vmatpush1.msra.mxu0 0.0
        %723 = vmatprep.subr.mxu0 0.0
        %724 = vmatpush1.msra.mxu0 0.0
        %725 = vmatprep.subr.mxu0 0.0
        %726 = vmatpush1.msra.mxu0 0.0
        %727 = vmatprep.subr.mxu0 0.0
        %728 = vmatpush1.msra.mxu0 0.0
        %729 = vmatprep.subr.mxu0 0.0
        %730 = vmatpush1.msra.mxu0 0.0
        %731 = vmatprep.subr.mxu0 0.0
        %732 = vmatpush1.msra.mxu0 0.0
        %733 = vmatprep.subr.mxu0 0.0
        %734 = vmatpush1.msra.mxu0 0.0
        %735 = vmatprep.subr.mxu0 0.0
        %736 = vmatpush1.msra.mxu0 0.0
        %737 = vmatprep.subr.mxu0 0.0
        %738 = vmatpush1.msra.mxu0 0.0
        %739 = vmatprep.mubr.f32.mxu0 0.0
        %v740 = vand.u32 %v279, 4294901760
        %v741 = vsub.f32 %v279, %v740
        %742 = vmatmul.mubr.f32.gmra.mrb[0].mxu0 %v741
        %v743 = vpop.f32.mrb[0].mxu0
        %v744 = vadd.f32 %v596, %v743
        %v745 = vpop.f32.mrb[0].mxu0
        %746 = vmatprep.mubr.f32.mxu0 0.0
        %v747 = vand.u32 %v282, 4294901760
        %v748 = vsub.f32 %v282, %v747
        %749 = vmatmul.mubr.f32.gmra.mrb[0].mxu0 %v748
        %v750 = vpop.f32.mrb[0].mxu0
        %v751 = vadd.f32 %v602, %v750
        %v752 = vpop.f32.mrb[0].mxu0
        %753 = vmatprep.mubr.f32.mxu0 0.0
        %v754 = vand.u32 %v285, 4294901760
        %v755 = vsub.f32 %v285, %v754
        %756 = vmatmul.mubr.f32.gmra.mrb[0].mxu0 %v755
        %v757 = vpop.f32.mrb[0].mxu0
        %v758 = vadd.f32 %v608, %v757
        %v759 = vpop.f32.mrb[0].mxu0
        %760 = vmatprep.mubr.f32.mxu0 0.0
        %v761 = vand.u32 %v288, 4294901760
        %v762 = vsub.f32 %v288, %v761
        %763 = vmatmul.mubr.f32.gmra.mrb[0].mxu0 %v762
        %v764 = vpop.f32.mrb[0].mxu0
        %v765 = vadd.f32 %v614, %v764
        %v766 = vpop.f32.mrb[0].mxu0
        %767 = vmatprep.mubr.f32.mxu0 0.0
        %v768 = vand.u32 %v291, 4294901760
        %v769 = vsub.f32 %v291, %v768
        %770 = vmatmul.mubr.f32.gmra.mrb[0].mxu0 %v769
        %v771 = vpop.f32.mrb[0].mxu0
        %v772 = vadd.f32 %v620, %v771
        %v773 = vpop.f32.mrb[0].mxu0
        %774 = vmatprep.mubr.f32.mxu0 0.0
        %v775 = vand.u32 %v294, 4294901760
        %v776 = vsub.f32 %v294, %v775
        %777 = vmatmul.mubr.f32.gmra.mrb[0].mxu0 %v776
        %v778 = vpop.f32.mrb[0].mxu0
        %v779 = vadd.f32 %v626, %v778
        %v780 = vpop.f32.mrb[0].mxu0
        %781 = vmatprep.mubr.f32.mxu0 0.0
        %v782 = vand.u32 %v297, 4294901760
        %v783 = vsub.f32 %v297, %v782
        %784 = vmatmul.mubr.f32.gmra.mrb[0].mxu0 %v783
        %v785 = vpop.f32.mrb[0].mxu0
        %v786 = vadd.f32 %v632, %v785
        %v787 = vpop.f32.mrb[0].mxu0
        %788 = vmatprep.mubr.f32.mxu0 0.0
        %v789 = vand.u32 %v300, 4294901760
        %v790 = vsub.f32 %v300, %v789
        %791 = vmatmul.mubr.f32.gmra.mrb[0].mxu0 %v790
        %v792 = vpop.f32.mrb[0].mxu0
        %v793 = vadd.f32 %v638, %v792
        %v794 = vpop.f32.mrb[0].mxu0
        %795 = vmatprep.mubr.f32.mxu0 0.0
        %v796 = vand.u32 %v303, 4294901760
        %v797 = vsub.f32 %v303, %v796
        %798 = vmatmul.mubr.f32.gmra.mrb[0].mxu0 %v797
        %v799 = vpop.f32.mrb[0].mxu0
        %v800 = vadd.f32 %v644, %v799
        %v801 = vpop.f32.mrb[0].mxu0
        %802 = vmatprep.mubr.f32.mxu0 0.0
        %v803 = vand.u32 %v306, 4294901760
        %v804 = vsub.f32 %v306, %v803
        %805 = vmatmul.mubr.f32.gmra.mrb[0].mxu0 %v804
        %v806 = vpop.f32.mrb[0].mxu0
        %v807 = vadd.f32 %v650, %v806
        %v808 = vpop.f32.mrb[0].mxu0
        %809 = vmatprep.mubr.f32.mxu0 0.0
        %v810 = vand.u32 %v309, 4294901760
        %v811 = vsub.f32 %v309, %v810
        %812 = vmatmul.mubr.f32.gmra.mrb[0].mxu0 %v811
        %v813 = vpop.f32.mrb[0].mxu0
        %v814 = vadd.f32 %v656, %v813
        %v815 = vpop.f32.mrb[0].mxu0
        %816 = vmatprep.mubr.f32.mxu0 0.0
        %v817 = vand.u32 %v312, 4294901760
        %v818 = vsub.f32 %v312, %v817
        %819 = vmatmul.mubr.f32.gmra.mrb[0].mxu0 %v818
        %v820 = vpop.f32.mrb[0].mxu0
        %v821 = vadd.f32 %v662, %v820
        %v822 = vpop.f32.mrb[0].mxu0
        %823 = vmatprep.mubr.f32.mxu0 0.0
        %v824 = vand.u32 %v315, 4294901760
        %v825 = vsub.f32 %v315, %v824
        %826 = vmatmul.mubr.f32.gmra.mrb[0].mxu0 %v825
        %v827 = vpop.f32.mrb[0].mxu0
        %v828 = vadd.f32 %v668, %v827
        %v829 = vpop.f32.mrb[0].mxu0
        %830 = vdwg.mxu0
        %831 = vmatprep.subr.mxu0 0.0
        %v832 = vand.u32 %v184, 4294901760
        %833 = vmatpush1.msra.mxu0 %v832
        %834 = vmatprep.subr.mxu0 0.0
        %v835 = vand.u32 %v319, 4294901760
        %836 = vmatpush1.msra.mxu0 %v835
        %837 = vmatprep.subr.mxu0 0.0
        %838 = vmatpush1.msra.mxu0 0.0
        %839 = vmatprep.subr.mxu0 0.0
        %840 = vmatpush1.msra.mxu0 0.0
        %841 = vmatprep.subr.mxu0 0.0
        %842 = vmatpush1.msra.mxu0 0.0
        %843 = vmatprep.subr.mxu0 0.0
        %844 = vmatpush1.msra.mxu0 0.0
        %845 = vmatprep.subr.mxu0 0.0
        %846 = vmatpush1.msra.mxu0 0.0
        %847 = vmatprep.subr.mxu0 0.0
        %848 = vmatpush1.msra.mxu0 0.0
        %849 = vmatprep.subr.mxu0 0.0
        %850 = vmatpush1.msra.mxu0 0.0
        %851 = vmatprep.subr.mxu0 0.0
        %852 = vmatpush1.msra.mxu0 0.0
        %853 = vmatprep.subr.mxu0 0.0
        %854 = vmatpush1.msra.mxu0 0.0
        %855 = vmatprep.subr.mxu0 0.0
        %856 = vmatpush1.msra.mxu0 0.0
        %857 = vmatprep.subr.mxu0 0.0
        %858 = vmatpush1.msra.mxu0 0.0
        %859 = vmatprep.subr.mxu0 0.0
        %860 = vmatpush1.msra.mxu0 0.0
        %861 = vmatprep.subr.mxu0 0.0
        %862 = vmatpush1.msra.mxu0 0.0
        %863 = vmatprep.subr.mxu0 0.0
        %864 = vmatpush1.msra.mxu0 0.0
        %865 = vmatprep.subr.mxu0 0.0
        %866 = vmatpush1.msra.mxu0 0.0
        %867 = vmatprep.subr.mxu0 0.0
        %868 = vmatpush1.msra.mxu0 0.0
        %869 = vmatprep.subr.mxu0 0.0
        %870 = vmatpush1.msra.mxu0 0.0
        %871 = vmatprep.subr.mxu0 0.0
        %872 = vmatpush1.msra.mxu0 0.0
        %873 = vmatprep.subr.mxu0 0.0
        %874 = vmatpush1.msra.mxu0 0.0
        %875 = vmatprep.subr.mxu0 0.0
        %876 = vmatpush1.msra.mxu0 0.0
        %877 = vmatprep.subr.mxu0 0.0
        %878 = vmatpush1.msra.mxu0 0.0
        %879 = vmatprep.subr.mxu0 0.0
        %880 = vmatpush1.msra.mxu0 0.0
        %881 = vmatprep.subr.mxu0 0.0
        %882 = vmatpush1.msra.mxu0 0.0
        %883 = vmatprep.subr.mxu0 0.0
        %884 = vmatpush1.msra.mxu0 0.0
        %885 = vmatprep.subr.mxu0 0.0
        %886 = vmatpush1.msra.mxu0 0.0
        %887 = vmatprep.subr.mxu0 0.0
        %888 = vmatpush1.msra.mxu0 0.0
        %889 = vmatprep.subr.mxu0 0.0
        %890 = vmatpush1.msra.mxu0 0.0
        %891 = vmatprep.subr.mxu0 0.0
        %892 = vmatpush1.msra.mxu0 0.0
        %893 = vmatprep.subr.mxu0 0.0
        %894 = vmatpush1.msra.mxu0 0.0
        %895 = vmatprep.subr.mxu0 0.0
        %896 = vmatpush1.msra.mxu0 0.0
        %897 = vmatprep.mubr.f32.mxu0 0.0
        %v898 = vand.u32 %v279, 4294901760
        %v899 = vsub.f32 %v279, %v898
        %v900 = vand.u32 %v899, 4294901760
        %901 = vmatmul.mubr.f32.gmra.mrb[0].mxu0 %v900
        %v902 = vpop.f32.mrb[0].mxu0
        %v903 = vadd.f32 %v744, %v902
        %v904 = vpop.f32.mrb[0].mxu0
        %905 = vmatprep.mubr.f32.mxu0 0.0
        %v906 = vand.u32 %v282, 4294901760
        %v907 = vsub.f32 %v282, %v906
        %v908 = vand.u32 %v907, 4294901760
        %909 = vmatmul.mubr.f32.gmra.mrb[0].mxu0 %v908
        %v910 = vpop.f32.mrb[0].mxu0
        %v911 = vadd.f32 %v751, %v910
        %v912 = vpop.f32.mrb[0].mxu0
        %913 = vmatprep.mubr.f32.mxu0 0.0
        %v914 = vand.u32 %v285, 4294901760
        %v915 = vsub.f32 %v285, %v914
        %v916 = vand.u32 %v915, 4294901760
        %917 = vmatmul.mubr.f32.gmra.mrb[0].mxu0 %v916
        %v918 = vpop.f32.mrb[0].mxu0
        %v919 = vadd.f32 %v758, %v918
        %v920 = vpop.f32.mrb[0].mxu0
        %921 = vmatprep.mubr.f32.mxu0 0.0
        %v922 = vand.u32 %v288, 4294901760
        %v923 = vsub.f32 %v288, %v922
        %v924 = vand.u32 %v923, 4294901760
        %925 = vmatmul.mubr.f32.gmra.mrb[0].mxu0 %v924
        %v926 = vpop.f32.mrb[0].mxu0
        %v927 = vadd.f32 %v765, %v926
        %v928 = vpop.f32.mrb[0].mxu0
        %929 = vmatprep.mubr.f32.mxu0 0.0
        %v930 = vand.u32 %v291, 4294901760
        %v931 = vsub.f32 %v291, %v930
        %v932 = vand.u32 %v931, 4294901760
        %933 = vmatmul.mubr.f32.gmra.mrb[0].mxu0 %v932
        %v934 = vpop.f32.mrb[0].mxu0
        %v935 = vadd.f32 %v772, %v934
        %v936 = vpop.f32.mrb[0].mxu0
        %937 = vmatprep.mubr.f32.mxu0 0.0
        %v938 = vand.u32 %v294, 4294901760
        %v939 = vsub.f32 %v294, %v938
        %v940 = vand.u32 %v939, 4294901760
        %941 = vmatmul.mubr.f32.gmra.mrb[0].mxu0 %v940
        %v942 = vpop.f32.mrb[0].mxu0
        %v943 = vadd.f32 %v779, %v942
        %v944 = vpop.f32.mrb[0].mxu0
        %945 = vmatprep.mubr.f32.mxu0 0.0
        %v946 = vand.u32 %v297, 4294901760
        %v947 = vsub.f32 %v297, %v946
        %v948 = vand.u32 %v947, 4294901760
        %949 = vmatmul.mubr.f32.gmra.mrb[0].mxu0 %v948
        %v950 = vpop.f32.mrb[0].mxu0
        %v951 = vadd.f32 %v786, %v950
        %v952 = vpop.f32.mrb[0].mxu0
        %953 = vmatprep.mubr.f32.mxu0 0.0
        %v954 = vand.u32 %v300, 4294901760
        %v955 = vsub.f32 %v300, %v954
        %v956 = vand.u32 %v955, 4294901760
        %957 = vmatmul.mubr.f32.gmra.mrb[0].mxu0 %v956
        %v958 = vpop.f32.mrb[0].mxu0
        %v959 = vadd.f32 %v793, %v958
        %v960 = vpop.f32.mrb[0].mxu0
        %961 = vmatprep.mubr.f32.mxu0 0.0
        %v962 = vand.u32 %v303, 4294901760
        %v963 = vsub.f32 %v303, %v962
        %v964 = vand.u32 %v963, 4294901760
        %965 = vmatmul.mubr.f32.gmra.mrb[0].mxu0 %v964
        %v966 = vpop.f32.mrb[0].mxu0
        %v967 = vadd.f32 %v800, %v966
        %v968 = vpop.f32.mrb[0].mxu0
        %969 = vmatprep.mubr.f32.mxu0 0.0
        %v970 = vand.u32 %v306, 4294901760
        %v971 = vsub.f32 %v306, %v970
        %v972 = vand.u32 %v971, 4294901760
        %973 = vmatmul.mubr.f32.gmra.mrb[0].mxu0 %v972
        %v974 = vpop.f32.mrb[0].mxu0
        %v975 = vadd.f32 %v807, %v974
        %v976 = vpop.f32.mrb[0].mxu0
        %977 = vmatprep.mubr.f32.mxu0 0.0
        %v978 = vand.u32 %v309, 4294901760
        %v979 = vsub.f32 %v309, %v978
        %v980 = vand.u32 %v979, 4294901760
        %981 = vmatmul.mubr.f32.gmra.mrb[0].mxu0 %v980
        %v982 = vpop.f32.mrb[0].mxu0
        %v983 = vadd.f32 %v814, %v982
        %v984 = vpop.f32.mrb[0].mxu0
        %985 = vmatprep.mubr.f32.mxu0 0.0
        %v986 = vand.u32 %v312, 4294901760
        %v987 = vsub.f32 %v312, %v986
        %v988 = vand.u32 %v987, 4294901760
        %989 = vmatmul.mubr.f32.gmra.mrb[0].mxu0 %v988
        %v990 = vpop.f32.mrb[0].mxu0
        %v991 = vadd.f32 %v821, %v990
        %v992 = vpop.f32.mrb[0].mxu0
        %993 = vmatprep.mubr.f32.mxu0 0.0
        %v994 = vand.u32 %v315, 4294901760
        %v995 = vsub.f32 %v315, %v994
        %v996 = vand.u32 %v995, 4294901760
        %997 = vmatmul.mubr.f32.gmra.mrb[0].mxu0 %v996
        %v998 = vpop.f32.mrb[0].mxu0
        %v999 = vadd.f32 %v828, %v998
        %v1000 = vpop.f32.mrb[0].mxu0
        %1001 = vdwg.mxu0
        %1002 = vmatprep.subr.mxu0 0.0
        %v1003 = vand.u32 %v184, 4294901760
        %v1004 = vsub.f32 %v184, %v1003
        %v1005 = vand.u32 %v1004, 4294901760
        %1006 = vmatpush1.msra.mxu0 %v1005
        %1007 = vmatprep.subr.mxu0 0.0
        %v1008 = vand.u32 %v319, 4294901760
        %v1009 = vsub.f32 %v319, %v1008
        %v1010 = vand.u32 %v1009, 4294901760
        %1011 = vmatpush1.msra.mxu0 %v1010
        %1012 = vmatprep.subr.mxu0 0.0
        %1013 = vmatpush1.msra.mxu0 0.0
        %1014 = vmatprep.subr.mxu0 0.0
        %1015 = vmatpush1.msra.mxu0 0.0
        %1016 = vmatprep.subr.mxu0 0.0
        %1017 = vmatpush1.msra.mxu0 0.0
        %1018 = vmatprep.subr.mxu0 0.0
        %1019 = vmatpush1.msra.mxu0 0.0
        %1020 = vmatprep.subr.mxu0 0.0
        %1021 = vmatpush1.msra.mxu0 0.0
        %1022 = vmatprep.subr.mxu0 0.0
        %1023 = vmatpush1.msra.mxu0 0.0
        %1024 = vmatprep.subr.mxu0 0.0
        %1025 = vmatpush1.msra.mxu0 0.0
        %1026 = vmatprep.subr.mxu0 0.0
        %1027 = vmatpush1.msra.mxu0 0.0
        %1028 = vmatprep.subr.mxu0 0.0
        %1029 = vmatpush1.msra.mxu0 0.0
        %1030 = vmatprep.subr.mxu0 0.0
        %1031 = vmatpush1.msra.mxu0 0.0
        %1032 = vmatprep.subr.mxu0 0.0
        %1033 = vmatpush1.msra.mxu0 0.0
        %1034 = vmatprep.subr.mxu0 0.0
        %1035 = vmatpush1.msra.mxu0 0.0
        %1036 = vmatprep.subr.mxu0 0.0
        %1037 = vmatpush1.msra.mxu0 0.0
        %1038 = vmatprep.subr.mxu0 0.0
        %1039 = vmatpush1.msra.mxu0 0.0
        %1040 = vmatprep.subr.mxu0 0.0
        %1041 = vmatpush1.msra.mxu0 0.0
        %1042 = vmatprep.subr.mxu0 0.0
        %1043 = vmatpush1.msra.mxu0 0.0
        %1044 = vmatprep.subr.mxu0 0.0
        %1045 = vmatpush1.msra.mxu0 0.0
        %1046 = vmatprep.subr.mxu0 0.0
        %1047 = vmatpush1.msra.mxu0 0.0
        %1048 = vmatprep.subr.mxu0 0.0
        %1049 = vmatpush1.msra.mxu0 0.0
        %1050 = vmatprep.subr.mxu0 0.0
        %1051 = vmatpush1.msra.mxu0 0.0
        %1052 = vmatprep.subr.mxu0 0.0
        %1053 = vmatpush1.msra.mxu0 0.0
        %1054 = vmatprep.subr.mxu0 0.0
        %1055 = vmatpush1.msra.mxu0 0.0
        %1056 = vmatprep.subr.mxu0 0.0
        %1057 = vmatpush1.msra.mxu0 0.0
        %1058 = vmatprep.subr.mxu0 0.0
        %1059 = vmatpush1.msra.mxu0 0.0
        %1060 = vmatprep.subr.mxu0 0.0
        %1061 = vmatpush1.msra.mxu0 0.0
        %1062 = vmatprep.subr.mxu0 0.0
        %1063 = vmatpush1.msra.mxu0 0.0
        %1064 = vmatprep.subr.mxu0 0.0
        %1065 = vmatpush1.msra.mxu0 0.0
        %1066 = vmatprep.subr.mxu0 0.0
        %1067 = vmatpush1.msra.mxu0 0.0
        %1068 = vmatprep.subr.mxu0 0.0
        %1069 = vmatpush1.msra.mxu0 0.0
        %1070 = vmatprep.subr.mxu0 0.0
        %1071 = vmatpush1.msra.mxu0 0.0
        %1072 = vmatprep.mubr.f32.mxu0 0.0
        %v1073 = vand.u32 %v279, 4294901760
        %1074 = vmatmul.mubr.f32.gmra.mrb[0].mxu0 %v1073
        %v1075 = vpop.f32.mrb[0].mxu0
        %v1076 = vadd.f32 %v903, %v1075
        %v1077 = vpop.f32.mrb[0].mxu0
        %1078 = vmatprep.mubr.f32.mxu0 0.0
        %v1079 = vand.u32 %v282, 4294901760
        %1080 = vmatmul.mubr.f32.gmra.mrb[0].mxu0 %v1079
        %v1081 = vpop.f32.mrb[0].mxu0
        %v1082 = vadd.f32 %v911, %v1081
        %v1083 = vpop.f32.mrb[0].mxu0
        %1084 = vmatprep.mubr.f32.mxu0 0.0
        %v1085 = vand.u32 %v285, 4294901760
        %1086 = vmatmul.mubr.f32.gmra.mrb[0].mxu0 %v1085
        %v1087 = vpop.f32.mrb[0].mxu0
        %v1088 = vadd.f32 %v919, %v1087
        %v1089 = vpop.f32.mrb[0].mxu0
        %1090 = vmatprep.mubr.f32.mxu0 0.0
        %v1091 = vand.u32 %v288, 4294901760
        %1092 = vmatmul.mubr.f32.gmra.mrb[0].mxu0 %v1091
        %v1093 = vpop.f32.mrb[0].mxu0
        %v1094 = vadd.f32 %v927, %v1093
        %v1095 = vpop.f32.mrb[0].mxu0
        %1096 = vmatprep.mubr.f32.mxu0 0.0
        %v1097 = vand.u32 %v291, 4294901760
        %1098 = vmatmul.mubr.f32.gmra.mrb[0].mxu0 %v1097
        %v1099 = vpop.f32.mrb[0].mxu0
        %v1100 = vadd.f32 %v935, %v1099
        %v1101 = vpop.f32.mrb[0].mxu0
        %1102 = vmatprep.mubr.f32.mxu0 0.0
        %v1103 = vand.u32 %v294, 4294901760
        %1104 = vmatmul.mubr.f32.gmra.mrb[0].mxu0 %v1103
        %v1105 = vpop.f32.mrb[0].mxu0
        %v1106 = vadd.f32 %v943, %v1105
        %v1107 = vpop.f32.mrb[0].mxu0
        %1108 = vmatprep.mubr.f32.mxu0 0.0
        %v1109 = vand.u32 %v297, 4294901760
        %1110 = vmatmul.mubr.f32.gmra.mrb[0].mxu0 %v1109
        %v1111 = vpop.f32.mrb[0].mxu0
        %v1112 = vadd.f32 %v951, %v1111
        %v1113 = vpop.f32.mrb[0].mxu0
        %1114 = vmatprep.mubr.f32.mxu0 0.0
        %v1115 = vand.u32 %v300, 4294901760
        %1116 = vmatmul.mubr.f32.gmra.mrb[0].mxu0 %v1115
        %v1117 = vpop.f32.mrb[0].mxu0
        %v1118 = vadd.f32 %v959, %v1117
        %v1119 = vpop.f32.mrb[0].mxu0
        %1120 = vmatprep.mubr.f32.mxu0 0.0
        %v1121 = vand.u32 %v303, 4294901760
        %1122 = vmatmul.mubr.f32.gmra.mrb[0].mxu0 %v1121
        %v1123 = vpop.f32.mrb[0].mxu0
        %v1124 = vadd.f32 %v967, %v1123
        %v1125 = vpop.f32.mrb[0].mxu0
        %1126 = vmatprep.mubr.f32.mxu0 0.0
        %v1127 = vand.u32 %v306, 4294901760
        %1128 = vmatmul.mubr.f32.gmra.mrb[0].mxu0 %v1127
        %v1129 = vpop.f32.mrb[0].mxu0
        %v1130 = vadd.f32 %v975, %v1129
        %v1131 = vpop.f32.mrb[0].mxu0
        %1132 = vmatprep.mubr.f32.mxu0 0.0
        %v1133 = vand.u32 %v309, 4294901760
        %1134 = vmatmul.mubr.f32.gmra.mrb[0].mxu0 %v1133
        %v1135 = vpop.f32.mrb[0].mxu0
        %v1136 = vadd.f32 %v983, %v1135
        %v1137 = vpop.f32.mrb[0].mxu0
        %1138 = vmatprep.mubr.f32.mxu0 0.0
        %v1139 = vand.u32 %v312, 4294901760
        %1140 = vmatmul.mubr.f32.gmra.mrb[0].mxu0 %v1139
        %v1141 = vpop.f32.mrb[0].mxu0
        %v1142 = vadd.f32 %v991, %v1141
        %v1143 = vpop.f32.mrb[0].mxu0
        %1144 = vmatprep.mubr.f32.mxu0 0.0
        %v1145 = vand.u32 %v315, 4294901760
        %1146 = vmatmul.mubr.f32.gmra.mrb[0].mxu0 %v1145
        %v1147 = vpop.f32.mrb[0].mxu0
        %v1148 = vadd.f32 %v999, %v1147
        %v1149 = vpop.f32.mrb[0].mxu0
        %1150 = vdwg.mxu0
        %1151 = vmatprep.subr.mxu0 0.0
        %v1152 = vand.u32 %v184, 4294901760
        %1153 = vmatpush1.msra.mxu0 %v1152
        %1154 = vmatprep.subr.mxu0 0.0
        %v1155 = vand.u32 %v319, 4294901760
        %1156 = vmatpush1.msra.mxu0 %v1155
        %1157 = vmatprep.subr.mxu0 0.0
        %1158 = vmatpush1.msra.mxu0 0.0
        %1159 = vmatprep.subr.mxu0 0.0
        %1160 = vmatpush1.msra.mxu0 0.0
        %1161 = vmatprep.subr.mxu0 0.0
        %1162 = vmatpush1.msra.mxu0 0.0
        %1163 = vmatprep.subr.mxu0 0.0
        %1164 = vmatpush1.msra.mxu0 0.0
        %1165 = vmatprep.subr.mxu0 0.0
        %1166 = vmatpush1.msra.mxu0 0.0
        %1167 = vmatprep.subr.mxu0 0.0
        %1168 = vmatpush1.msra.mxu0 0.0
        %1169 = vmatprep.subr.mxu0 0.0
        %1170 = vmatpush1.msra.mxu0 0.0
        %1171 = vmatprep.subr.mxu0 0.0
        %1172 = vmatpush1.msra.mxu0 0.0
        %1173 = vmatprep.subr.mxu0 0.0
        %1174 = vmatpush1.msra.mxu0 0.0
        %1175 = vmatprep.subr.mxu0 0.0
        %1176 = vmatpush1.msra.mxu0 0.0
        %1177 = vmatprep.subr.mxu0 0.0
        %1178 = vmatpush1.msra.mxu0 0.0
        %1179 = vmatprep.subr.mxu0 0.0
        %1180 = vmatpush1.msra.mxu0 0.0
        %1181 = vmatprep.subr.mxu0 0.0
        %1182 = vmatpush1.msra.mxu0 0.0
        %1183 = vmatprep.subr.mxu0 0.0
        %1184 = vmatpush1.msra.mxu0 0.0
        %1185 = vmatprep.subr.mxu0 0.0
        %1186 = vmatpush1.msra.mxu0 0.0
        %1187 = vmatprep.subr.mxu0 0.0
        %1188 = vmatpush1.msra.mxu0 0.0
        %1189 = vmatprep.subr.mxu0 0.0
        %1190 = vmatpush1.msra.mxu0 0.0
        %1191 = vmatprep.subr.mxu0 0.0
        %1192 = vmatpush1.msra.mxu0 0.0
        %1193 = vmatprep.subr.mxu0 0.0
        %1194 = vmatpush1.msra.mxu0 0.0
        %1195 = vmatprep.subr.mxu0 0.0
        %1196 = vmatpush1.msra.mxu0 0.0
        %1197 = vmatprep.subr.mxu0 0.0
        %1198 = vmatpush1.msra.mxu0 0.0
        %1199 = vmatprep.subr.mxu0 0.0
        %1200 = vmatpush1.msra.mxu0 0.0
        %1201 = vmatprep.subr.mxu0 0.0
        %1202 = vmatpush1.msra.mxu0 0.0
        %1203 = vmatprep.subr.mxu0 0.0
        %1204 = vmatpush1.msra.mxu0 0.0
        %1205 = vmatprep.subr.mxu0 0.0
        %1206 = vmatpush1.msra.mxu0 0.0
        %1207 = vmatprep.subr.mxu0 0.0
        %1208 = vmatpush1.msra.mxu0 0.0
        %1209 = vmatprep.subr.mxu0 0.0
        %1210 = vmatpush1.msra.mxu0 0.0
        %1211 = vmatprep.subr.mxu0 0.0
        %1212 = vmatpush1.msra.mxu0 0.0
        %1213 = vmatprep.subr.mxu0 0.0
        %1214 = vmatpush1.msra.mxu0 0.0
        %1215 = vmatprep.subr.mxu0 0.0
        %1216 = vmatpush1.msra.mxu0 0.0
        %1217 = vmatprep.mubr.f32.mxu0 0.0
        %v1218 = vand.u32 %v279, 4294901760
        %1219 = vmatmul.mubr.f32.gmra.mrb[0].mxu0 %v1218
        %v1220 = vpop.f32.mrb[0].mxu0
        %v1221 = vadd.f32 %v1076, %v1220
        %v1222 = vpop.f32.mrb[0].mxu0
        %1223 = vmatprep.mubr.f32.mxu0 0.0
        %v1224 = vand.u32 %v282, 4294901760
        %1225 = vmatmul.mubr.f32.gmra.mrb[0].mxu0 %v1224
        %v1226 = vpop.f32.mrb[0].mxu0
        %v1227 = vadd.f32 %v1082, %v1226
        %v1228 = vpop.f32.mrb[0].mxu0
        %1229 = vmatprep.mubr.f32.mxu0 0.0
        %v1230 = vand.u32 %v285, 4294901760
        %1231 = vmatmul.mubr.f32.gmra.mrb[0].mxu0 %v1230
        %v1232 = vpop.f32.mrb[0].mxu0
        %v1233 = vadd.f32 %v1088, %v1232
        %v1234 = vpop.f32.mrb[0].mxu0
        %1235 = vmatprep.mubr.f32.mxu0 0.0
        %v1236 = vand.u32 %v288, 4294901760
        %1237 = vmatmul.mubr.f32.gmra.mrb[0].mxu0 %v1236
        %v1238 = vpop.f32.mrb[0].mxu0
        %v1239 = vadd.f32 %v1094, %v1238
        %v1240 = vpop.f32.mrb[0].mxu0
        %1241 = vmatprep.mubr.f32.mxu0 0.0
        %v1242 = vand.u32 %v291, 4294901760
        %1243 = vmatmul.mubr.f32.gmra.mrb[0].mxu0 %v1242
        %v1244 = vpop.f32.mrb[0].mxu0
        %v1245 = vadd.f32 %v1100, %v1244
        %v1246 = vpop.f32.mrb[0].mxu0
        %1247 = vmatprep.mubr.f32.mxu0 0.0
        %v1248 = vand.u32 %v294, 4294901760
        %1249 = vmatmul.mubr.f32.gmra.mrb[0].mxu0 %v1248
        %v1250 = vpop.f32.mrb[0].mxu0
        %v1251 = vadd.f32 %v1106, %v1250
        %v1252 = vpop.f32.mrb[0].mxu0
        %1253 = vmatprep.mubr.f32.mxu0 0.0
        %v1254 = vand.u32 %v297, 4294901760
        %1255 = vmatmul.mubr.f32.gmra.mrb[0].mxu0 %v1254
        %v1256 = vpop.f32.mrb[0].mxu0
        %v1257 = vadd.f32 %v1112, %v1256
        %v1258 = vpop.f32.mrb[0].mxu0
        %1259 = vmatprep.mubr.f32.mxu0 0.0
        %v1260 = vand.u32 %v300, 4294901760
        %1261 = vmatmul.mubr.f32.gmra.mrb[0].mxu0 %v1260
        %v1262 = vpop.f32.mrb[0].mxu0
        %v1263 = vadd.f32 %v1118, %v1262
        %v1264 = vpop.f32.mrb[0].mxu0
        %1265 = vmatprep.mubr.f32.mxu0 0.0
        %v1266 = vand.u32 %v303, 4294901760
        %1267 = vmatmul.mubr.f32.gmra.mrb[0].mxu0 %v1266
        %v1268 = vpop.f32.mrb[0].mxu0
        %v1269 = vadd.f32 %v1124, %v1268
        %v1270 = vpop.f32.mrb[0].mxu0
        %1271 = vmatprep.mubr.f32.mxu0 0.0
        %v1272 = vand.u32 %v306, 4294901760
        %1273 = vmatmul.mubr.f32.gmra.mrb[0].mxu0 %v1272
        %v1274 = vpop.f32.mrb[0].mxu0
        %v1275 = vadd.f32 %v1130, %v1274
        %v1276 = vpop.f32.mrb[0].mxu0
        %1277 = vmatprep.mubr.f32.mxu0 0.0
        %v1278 = vand.u32 %v309, 4294901760
        %1279 = vmatmul.mubr.f32.gmra.mrb[0].mxu0 %v1278
        %v1280 = vpop.f32.mrb[0].mxu0
        %v1281 = vadd.f32 %v1136, %v1280
        %v1282 = vpop.f32.mrb[0].mxu0
        %1283 = vmatprep.mubr.f32.mxu0 0.0
        %v1284 = vand.u32 %v312, 4294901760
        %1285 = vmatmul.mubr.f32.gmra.mrb[0].mxu0 %v1284
        %v1286 = vpop.f32.mrb[0].mxu0
        %v1287 = vadd.f32 %v1142, %v1286
        %v1288 = vpop.f32.mrb[0].mxu0
        %1289 = vmatprep.mubr.f32.mxu0 0.0
        %v1290 = vand.u32 %v315, 4294901760
        %1291 = vmatmul.mubr.f32.gmra.mrb[0].mxu0 %v1290
        %v1292 = vpop.f32.mrb[0].mxu0
        %v1293 = vadd.f32 %v1148, %v1292
        %v1294 = vpop.f32.mrb[0].mxu0
        %1295 = vdwg.mxu0
        %v1296 = vmax.f32 %v1221, 0.0
        %v1297 = vmax.f32 %v1227, 0.0
        %v1298 = vmax.f32 %v1233, 0.0
        %v1299 = vmax.f32 %v1239, 0.0
        %v1300 = vmax.f32 %v1245, 0.0
        %v1301 = vmax.f32 %v1251, 0.0
        %v1302 = vmax.f32 %v1257, 0.0
        %v1303 = vmax.f32 %v1263, 0.0
        %v1304 = vmax.f32 %v1269, 0.0
        %v1305 = vmax.f32 %v1275, 0.0
        %v1306 = vmax.f32 %v1281, 0.0
        %v1307 = vmax.f32 %v1287, 0.0
        %v1308 = vmax.f32 %v1293, 0.0
        %v1309 = vld [vmem:[#allocation2 + $0xd0] sm:$0xff]
        %v1310 = vld [vmem:[#allocation2 + $0xd8] sm:$0x3]
        %v1311 = vld [vmem:[#allocation2 + $0xe0] sm:$0xff]
        %v1312 = vld [vmem:[#allocation2 + $0xe8] sm:$0x3]
        %1314 = vset.pattern.permute.xlu0 0
        %1315 = vperm.xlu0 %1314, %v1311
        %v1316 = vpop.permute.xlu0 %1315
        %1319 = vset.pattern.permute.xlu0 0
        %1320 = vperm.xlu0 %1319, %v1312
        %v1321 = vpop.permute.xlu0 %1320
        %vm1323 = vcmask 818176
        %v1325 = vsel %vm1323, %v1309, 0
        %v1328 = vsel %vm1323, %v1310, 0
        %vm1330 = vcmask 1043456
        %v1332 = vsel %vm1330, %v1308, 0
        %1334 = vmatprep.subr.mxu0 0.0
        %v1335 = vand.u32 %v1296, 4294901760
        %1336 = vmatpush1.msra.mxu0 %v1335
        %1337 = vmatprep.subr.mxu0 0.0
        %v1338 = vand.u32 %v1297, 4294901760
        %1339 = vmatpush1.msra.mxu0 %v1338
        %1340 = vmatprep.subr.mxu0 0.0
        %v1341 = vand.u32 %v1298, 4294901760
        %1342 = vmatpush1.msra.mxu0 %v1341
        %1343 = vmatprep.subr.mxu0 0.0
        %v1344 = vand.u32 %v1299, 4294901760
        %1345 = vmatpush1.msra.mxu0 %v1344
        %1346 = vmatprep.subr.mxu0 0.0
        %v1347 = vand.u32 %v1300, 4294901760
        %1348 = vmatpush1.msra.mxu0 %v1347
        %1349 = vmatprep.subr.mxu0 0.0
        %v1350 = vand.u32 %v1301, 4294901760
        %1351 = vmatpush1.msra.mxu0 %v1350
        %1352 = vmatprep.subr.mxu0 0.0
        %v1353 = vand.u32 %v1302, 4294901760
        %1354 = vmatpush1.msra.mxu0 %v1353
        %1355 = vmatprep.subr.mxu0 0.0
        %v1356 = vand.u32 %v1303, 4294901760
        %1357 = vmatpush1.msra.mxu0 %v1356
        %1358 = vmatprep.subr.mxu0 0.0
        %v1359 = vand.u32 %v1304, 4294901760
        %1360 = vmatpush1.msra.mxu0 %v1359
        %1361 = vmatprep.subr.mxu0 0.0
        %v1362 = vand.u32 %v1305, 4294901760
        %1363 = vmatpush1.msra.mxu0 %v1362
        %1364 = vmatprep.subr.mxu0 0.0
        %v1365 = vand.u32 %v1306, 4294901760
        %1366 = vmatpush1.msra.mxu0 %v1365
        %1367 = vmatprep.subr.mxu0 0.0
        %v1368 = vand.u32 %v1307, 4294901760
        %1369 = vmatpush1.msra.mxu0 %v1368
        %1370 = vmatprep.subr.mxu0 0.0
        %v1371 = vand.u32 %v1332, 4294901760
        %1372 = vmatpush1.msra.mxu0 %v1371
        %1373 = vmatprep.subr.mxu0 0.0
        %1374 = vmatpush1.msra.mxu0 0.0
        %1375 = vmatprep.subr.mxu0 0.0
        %1376 = vmatpush1.msra.mxu0 0.0
        %1377 = vmatprep.subr.mxu0 0.0
        %1378 = vmatpush1.msra.mxu0 0.0
        %1379 = vmatprep.subr.mxu0 0.0
        %1380 = vmatpush1.msra.mxu0 0.0
        %1381 = vmatprep.subr.mxu0 0.0
        %1382 = vmatpush1.msra.mxu0 0.0
        %1383 = vmatprep.subr.mxu0 0.0
        %1384 = vmatpush1.msra.mxu0 0.0
        %1385 = vmatprep.subr.mxu0 0.0
        %1386 = vmatpush1.msra.mxu0 0.0
        %1387 = vmatprep.subr.mxu0 0.0
        %1388 = vmatpush1.msra.mxu0 0.0
        %1389 = vmatprep.subr.mxu0 0.0
        %1390 = vmatpush1.msra.mxu0 0.0
        %1391 = vmatprep.subr.mxu0 0.0
        %1392 = vmatpush1.msra.mxu0 0.0
        %1393 = vmatprep.subr.mxu0 0.0
        %1394 = vmatpush1.msra.mxu0 0.0
        %1395 = vmatprep.subr.mxu0 0.0
        %1396 = vmatpush1.msra.mxu0 0.0
        %1397 = vmatprep.subr.mxu0 0.0
        %1398 = vmatpush1.msra.mxu0 0.0
        %1399 = vmatprep.subr.mxu0 0.0
        %1400 = vmatpush1.msra.mxu0 0.0
        %1401 = vmatprep.subr.mxu0 0.0
        %1402 = vmatpush1.msra.mxu0 0.0
        %1403 = vmatprep.subr.mxu0 0.0
        %1404 = vmatpush1.msra.mxu0 0.0
        %1405 = vmatprep.subr.mxu0 0.0
        %1406 = vmatpush1.msra.mxu0 0.0
        %1407 = vmatprep.subr.mxu0 0.0
        %1408 = vmatpush1.msra.mxu0 0.0
        %1409 = vmatprep.subr.mxu0 0.0
        %1410 = vmatpush1.msra.mxu0 0.0
        %1411 = vmatprep.mubr.f32.mxu0 0.0
        %v1412 = vand.u32 %v1325, 4294901760
        %v1413 = vsub.f32 %v1325, %v1412
        %v1414 = vand.u32 %v1413, 4294901760
        %v1415 = vsub.f32 %v1413, %v1414
        %v1416 = vand.u32 %v1415, 4294901760
        %1417 = vmatmul.mubr.f32.gmra.mrb[0].mxu0 %v1416
        %v1418 = vpop.f32.mrb[0].mxu0
        %v1419 = vadd.f32 %v1316, %v1418
        %v1420 = vpop.f32.mrb[0].mxu0
        %1421 = vmatprep.mubr.f32.mxu0 0.0
        %v1422 = vand.u32 %v1328, 4294901760
        %v1423 = vsub.f32 %v1328, %v1422
        %v1424 = vand.u32 %v1423, 4294901760
        %v1425 = vsub.f32 %v1423, %v1424
        %v1426 = vand.u32 %v1425, 4294901760
        %1427 = vmatmul.mubr.f32.gmra.mrb[0].mxu0 %v1426
        %v1428 = vpop.f32.mrb[0].mxu0
        %v1429 = vadd.f32 %v1321, %v1428
        %v1430 = vpop.f32.mrb[0].mxu0
        %1431 = vdwg.mxu0
        %1432 = vmatprep.subr.mxu0 0.0
        %v1433 = vand.u32 %v1296, 4294901760
        %v1434 = vsub.f32 %v1296, %v1433
        %v1435 = vand.u32 %v1434, 4294901760
        %v1436 = vsub.f32 %v1434, %v1435
        %v1437 = vand.u32 %v1436, 4294901760
        %1438 = vmatpush1.msra.mxu0 %v1437
        %1439 = vmatprep.subr.mxu0 0.0
        %v1440 = vand.u32 %v1297, 4294901760
        %v1441 = vsub.f32 %v1297, %v1440
        %v1442 = vand.u32 %v1441, 4294901760
        %v1443 = vsub.f32 %v1441, %v1442
        %v1444 = vand.u32 %v1443, 4294901760
        %1445 = vmatpush1.msra.mxu0 %v1444
        %1446 = vmatprep.subr.mxu0 0.0
        %v1447 = vand.u32 %v1298, 4294901760
        %v1448 = vsub.f32 %v1298, %v1447
        %v1449 = vand.u32 %v1448, 4294901760
        %v1450 = vsub.f32 %v1448, %v1449
        %v1451 = vand.u32 %v1450, 4294901760
        %1452 = vmatpush1.msra.mxu0 %v1451
        %1453 = vmatprep.subr.mxu0 0.0
        %v1454 = vand.u32 %v1299, 4294901760
        %v1455 = vsub.f32 %v1299, %v1454
        %v1456 = vand.u32 %v1455, 4294901760
        %v1457 = vsub.f32 %v1455, %v1456
        %v1458 = vand.u32 %v1457, 4294901760
        %1459 = vmatpush1.msra.mxu0 %v1458
        %1460 = vmatprep.subr.mxu0 0.0
        %v1461 = vand.u32 %v1300, 4294901760
        %v1462 = vsub.f32 %v1300, %v1461
        %v1463 = vand.u32 %v1462, 4294901760
        %v1464 = vsub.f32 %v1462, %v1463
        %v1465 = vand.u32 %v1464, 4294901760
        %1466 = vmatpush1.msra.mxu0 %v1465
        %1467 = vmatprep.subr.mxu0 0.0
        %v1468 = vand.u32 %v1301, 4294901760
        %v1469 = vsub.f32 %v1301, %v1468
        %v1470 = vand.u32 %v1469, 4294901760
        %v1471 = vsub.f32 %v1469, %v1470
        %v1472 = vand.u32 %v1471, 4294901760
        %1473 = vmatpush1.msra.mxu0 %v1472
        %1474 = vmatprep.subr.mxu0 0.0
        %v1475 = vand.u32 %v1302, 4294901760
        %v1476 = vsub.f32 %v1302, %v1475
        %v1477 = vand.u32 %v1476, 4294901760
        %v1478 = vsub.f32 %v1476, %v1477
        %v1479 = vand.u32 %v1478, 4294901760
        %1480 = vmatpush1.msra.mxu0 %v1479
        %1481 = vmatprep.subr.mxu0 0.0
        %v1482 = vand.u32 %v1303, 4294901760
        %v1483 = vsub.f32 %v1303, %v1482
        %v1484 = vand.u32 %v1483, 4294901760
        %v1485 = vsub.f32 %v1483, %v1484
        %v1486 = vand.u32 %v1485, 4294901760
        %1487 = vmatpush1.msra.mxu0 %v1486
        %1488 = vmatprep.subr.mxu0 0.0
        %v1489 = vand.u32 %v1304, 4294901760
        %v1490 = vsub.f32 %v1304, %v1489
        %v1491 = vand.u32 %v1490, 4294901760
        %v1492 = vsub.f32 %v1490, %v1491
        %v1493 = vand.u32 %v1492, 4294901760
        %1494 = vmatpush1.msra.mxu0 %v1493
        %1495 = vmatprep.subr.mxu0 0.0
        %v1496 = vand.u32 %v1305, 4294901760
        %v1497 = vsub.f32 %v1305, %v1496
        %v1498 = vand.u32 %v1497, 4294901760
        %v1499 = vsub.f32 %v1497, %v1498
        %v1500 = vand.u32 %v1499, 4294901760
        %1501 = vmatpush1.msra.mxu0 %v1500
        %1502 = vmatprep.subr.mxu0 0.0
        %v1503 = vand.u32 %v1306, 4294901760
        %v1504 = vsub.f32 %v1306, %v1503
        %v1505 = vand.u32 %v1504, 4294901760
        %v1506 = vsub.f32 %v1504, %v1505
        %v1507 = vand.u32 %v1506, 4294901760
        %1508 = vmatpush1.msra.mxu0 %v1507
        %1509 = vmatprep.subr.mxu0 0.0
        %v1510 = vand.u32 %v1307, 4294901760
        %v1511 = vsub.f32 %v1307, %v1510
        %v1512 = vand.u32 %v1511, 4294901760
        %v1513 = vsub.f32 %v1511, %v1512
        %v1514 = vand.u32 %v1513, 4294901760
        %1515 = vmatpush1.msra.mxu0 %v1514
        %1516 = vmatprep.subr.mxu0 0.0
        %v1517 = vand.u32 %v1332, 4294901760
        %v1518 = vsub.f32 %v1332, %v1517
        %v1519 = vand.u32 %v1518, 4294901760
        %v1520 = vsub.f32 %v1518, %v1519
        %v1521 = vand.u32 %v1520, 4294901760
        %1522 = vmatpush1.msra.mxu0 %v1521
        %1523 = vmatprep.subr.mxu0 0.0
        %1524 = vmatpush1.msra.mxu0 0.0
        %1525 = vmatprep.subr.mxu0 0.0
        %1526 = vmatpush1.msra.mxu0 0.0
        %1527 = vmatprep.subr.mxu0 0.0
        %1528 = vmatpush1.msra.mxu0 0.0
        %1529 = vmatprep.subr.mxu0 0.0
        %1530 = vmatpush1.msra.mxu0 0.0
        %1531 = vmatprep.subr.mxu0 0.0
        %1532 = vmatpush1.msra.mxu0 0.0
        %1533 = vmatprep.subr.mxu0 0.0
        %1534 = vmatpush1.msra.mxu0 0.0
        %1535 = vmatprep.subr.mxu0 0.0
        %1536 = vmatpush1.msra.mxu0 0.0
        %1537 = vmatprep.subr.mxu0 0.0
        %1538 = vmatpush1.msra.mxu0 0.0
        %1539 = vmatprep.subr.mxu0 0.0
        %1540 = vmatpush1.msra.mxu0 0.0
        %1541 = vmatprep.subr.mxu0 0.0
        %1542 = vmatpush1.msra.mxu0 0.0
        %1543 = vmatprep.subr.mxu0 0.0
        %1544 = vmatpush1.msra.mxu0 0.0
        %1545 = vmatprep.subr.mxu0 0.0
        %1546 = vmatpush1.msra.mxu0 0.0
        %1547 = vmatprep.subr.mxu0 0.0
        %1548 = vmatpush1.msra.mxu0 0.0
        %1549 = vmatprep.subr.mxu0 0.0
        %1550 = vmatpush1.msra.mxu0 0.0
        %1551 = vmatprep.subr.mxu0 0.0
        %1552 = vmatpush1.msra.mxu0 0.0
        %1553 = vmatprep.subr.mxu0 0.0
        %1554 = vmatpush1.msra.mxu0 0.0
        %1555 = vmatprep.subr.mxu0 0.0
        %1556 = vmatpush1.msra.mxu0 0.0
        %1557 = vmatprep.subr.mxu0 0.0
        %1558 = vmatpush1.msra.mxu0 0.0
        %1559 = vmatprep.subr.mxu0 0.0
        %1560 = vmatpush1.msra.mxu0 0.0
        %1561 = vmatprep.mubr.f32.mxu0 0.0
        %v1562 = vand.u32 %v1325, 4294901760
        %1563 = vmatmul.mubr.f32.gmra.mrb[0].mxu0 %v1562
        %v1564 = vpop.f32.mrb[0].mxu0
        %v1565 = vadd.f32 %v1419, %v1564
        %v1566 = vpop.f32.mrb[0].mxu0
        %1567 = vmatprep.mubr.f32.mxu0 0.0
        %v1568 = vand.u32 %v1328, 4294901760
        %1569 = vmatmul.mubr.f32.gmra.mrb[0].mxu0 %v1568
        %v1570 = vpop.f32.mrb[0].mxu0
        %v1571 = vadd.f32 %v1429, %v1570
        %v1572 = vpop.f32.mrb[0].mxu0
        %1573 = vdwg.mxu0
        %1574 = vmatprep.subr.mxu0 0.0
        %v1575 = vand.u32 %v1296, 4294901760
        %v1576 = vsub.f32 %v1296, %v1575
        %1577 = vmatpush1.msra.mxu0 %v1576
        %1578 = vmatprep.subr.mxu0 0.0
        %v1579 = vand.u32 %v1297, 4294901760
        %v1580 = vsub.f32 %v1297, %v1579
        %1581 = vmatpush1.msra.mxu0 %v1580
        %1582 = vmatprep.subr.mxu0 0.0
        %v1583 = vand.u32 %v1298, 4294901760
        %v1584 = vsub.f32 %v1298, %v1583
        %1585 = vmatpush1.msra.mxu0 %v1584
        %1586 = vmatprep.subr.mxu0 0.0
        %v1587 = vand.u32 %v1299, 4294901760
        %v1588 = vsub.f32 %v1299, %v1587
        %1589 = vmatpush1.msra.mxu0 %v1588
        %1590 = vmatprep.subr.mxu0 0.0
        %v1591 = vand.u32 %v1300, 4294901760
        %v1592 = vsub.f32 %v1300, %v1591
        %1593 = vmatpush1.msra.mxu0 %v1592
        %1594 = vmatprep.subr.mxu0 0.0
        %v1595 = vand.u32 %v1301, 4294901760
        %v1596 = vsub.f32 %v1301, %v1595
        %1597 = vmatpush1.msra.mxu0 %v1596
        %1598 = vmatprep.subr.mxu0 0.0
        %v1599 = vand.u32 %v1302, 4294901760
        %v1600 = vsub.f32 %v1302, %v1599
        %1601 = vmatpush1.msra.mxu0 %v1600
        %1602 = vmatprep.subr.mxu0 0.0
        %v1603 = vand.u32 %v1303, 4294901760
        %v1604 = vsub.f32 %v1303, %v1603
        %1605 = vmatpush1.msra.mxu0 %v1604
        %1606 = vmatprep.subr.mxu0 0.0
        %v1607 = vand.u32 %v1304, 4294901760
        %v1608 = vsub.f32 %v1304, %v1607
        %1609 = vmatpush1.msra.mxu0 %v1608
        %1610 = vmatprep.subr.mxu0 0.0
        %v1611 = vand.u32 %v1305, 4294901760
        %v1612 = vsub.f32 %v1305, %v1611
        %1613 = vmatpush1.msra.mxu0 %v1612
        %1614 = vmatprep.subr.mxu0 0.0
        %v1615 = vand.u32 %v1306, 4294901760
        %v1616 = vsub.f32 %v1306, %v1615
        %1617 = vmatpush1.msra.mxu0 %v1616
        %1618 = vmatprep.subr.mxu0 0.0
        %v1619 = vand.u32 %v1307, 4294901760
        %v1620 = vsub.f32 %v1307, %v1619
        %1621 = vmatpush1.msra.mxu0 %v1620
        %1622 = vmatprep.subr.mxu0 0.0
        %v1623 = vand.u32 %v1332, 4294901760
        %v1624 = vsub.f32 %v1332, %v1623
        %1625 = vmatpush1.msra.mxu0 %v1624
        %1626 = vmatprep.subr.mxu0 0.0
        %1627 = vmatpush1.msra.mxu0 0.0
        %1628 = vmatprep.subr.mxu0 0.0
        %1629 = vmatpush1.msra.mxu0 0.0
        %1630 = vmatprep.subr.mxu0 0.0
        %1631 = vmatpush1.msra.mxu0 0.0
        %1632 = vmatprep.subr.mxu0 0.0
        %1633 = vmatpush1.msra.mxu0 0.0
        %1634 = vmatprep.subr.mxu0 0.0
        %1635 = vmatpush1.msra.mxu0 0.0
        %1636 = vmatprep.subr.mxu0 0.0
        %1637 = vmatpush1.msra.mxu0 0.0
        %1638 = vmatprep.subr.mxu0 0.0
        %1639 = vmatpush1.msra.mxu0 0.0
        %1640 = vmatprep.subr.mxu0 0.0
        %1641 = vmatpush1.msra.mxu0 0.0
        %1642 = vmatprep.subr.mxu0 0.0
        %1643 = vmatpush1.msra.mxu0 0.0
        %1644 = vmatprep.subr.mxu0 0.0
        %1645 = vmatpush1.msra.mxu0 0.0
        %1646 = vmatprep.subr.mxu0 0.0
        %1647 = vmatpush1.msra.mxu0 0.0
        %1648 = vmatprep.subr.mxu0 0.0
        %1649 = vmatpush1.msra.mxu0 0.0
        %1650 = vmatprep.subr.mxu0 0.0
        %1651 = vmatpush1.msra.mxu0 0.0
        %1652 = vmatprep.subr.mxu0 0.0
        %1653 = vmatpush1.msra.mxu0 0.0
        %1654 = vmatprep.subr.mxu0 0.0
        %1655 = vmatpush1.msra.mxu0 0.0
        %1656 = vmatprep.subr.mxu0 0.0
        %1657 = vmatpush1.msra.mxu0 0.0
        %1658 = vmatprep.subr.mxu0 0.0
        %1659 = vmatpush1.msra.mxu0 0.0
        %1660 = vmatprep.subr.mxu0 0.0
        %1661 = vmatpush1.msra.mxu0 0.0
        %1662 = vmatprep.subr.mxu0 0.0
        %1663 = vmatpush1.msra.mxu0 0.0
        %1664 = vmatprep.mubr.f32.mxu0 0.0
        %v1665 = vand.u32 %v1325, 4294901760
        %v1666 = vsub.f32 %v1325, %v1665
        %1667 = vmatmul.mubr.f32.gmra.mrb[0].mxu0 %v1666
        %v1668 = vpop.f32.mrb[0].mxu0
        %v1669 = vadd.f32 %v1565, %v1668
        %v1670 = vpop.f32.mrb[0].mxu0
        %1671 = vmatprep.mubr.f32.mxu0 0.0
        %v1672 = vand.u32 %v1328, 4294901760
        %v1673 = vsub.f32 %v1328, %v1672
        %1674 = vmatmul.mubr.f32.gmra.mrb[0].mxu0 %v1673
        %v1675 = vpop.f32.mrb[0].mxu0
        %v1676 = vadd.f32 %v1571, %v1675
        %v1677 = vpop.f32.mrb[0].mxu0
        %1678 = vdwg.mxu0
        %1679 = vmatprep.subr.mxu0 0.0
        %v1680 = vand.u32 %v1296, 4294901760
        %1681 = vmatpush1.msra.mxu0 %v1680
        %1682 = vmatprep.subr.mxu0 0.0
        %v1683 = vand.u32 %v1297, 4294901760
        %1684 = vmatpush1.msra.mxu0 %v1683
        %1685 = vmatprep.subr.mxu0 0.0
        %v1686 = vand.u32 %v1298, 4294901760
        %1687 = vmatpush1.msra.mxu0 %v1686
        %1688 = vmatprep.subr.mxu0 0.0
        %v1689 = vand.u32 %v1299, 4294901760
        %1690 = vmatpush1.msra.mxu0 %v1689
        %1691 = vmatprep.subr.mxu0 0.0
        %v1692 = vand.u32 %v1300, 4294901760
        %1693 = vmatpush1.msra.mxu0 %v1692
        %1694 = vmatprep.subr.mxu0 0.0
        %v1695 = vand.u32 %v1301, 4294901760
        %1696 = vmatpush1.msra.mxu0 %v1695
        %1697 = vmatprep.subr.mxu0 0.0
        %v1698 = vand.u32 %v1302, 4294901760
        %1699 = vmatpush1.msra.mxu0 %v1698
        %1700 = vmatprep.subr.mxu0 0.0
        %v1701 = vand.u32 %v1303, 4294901760
        %1702 = vmatpush1.msra.mxu0 %v1701
        %1703 = vmatprep.subr.mxu0 0.0
        %v1704 = vand.u32 %v1304, 4294901760
        %1705 = vmatpush1.msra.mxu0 %v1704
        %1706 = vmatprep.subr.mxu0 0.0
        %v1707 = vand.u32 %v1305, 4294901760
        %1708 = vmatpush1.msra.mxu0 %v1707
        %1709 = vmatprep.subr.mxu0 0.0
        %v1710 = vand.u32 %v1306, 4294901760
        %1711 = vmatpush1.msra.mxu0 %v1710
        %1712 = vmatprep.subr.mxu0 0.0
        %v1713 = vand.u32 %v1307, 4294901760
        %1714 = vmatpush1.msra.mxu0 %v1713
        %1715 = vmatprep.subr.mxu0 0.0
        %v1716 = vand.u32 %v1332, 4294901760
        %1717 = vmatpush1.msra.mxu0 %v1716
        %1718 = vmatprep.subr.mxu0 0.0
        %1719 = vmatpush1.msra.mxu0 0.0
        %1720 = vmatprep.subr.mxu0 0.0
        %1721 = vmatpush1.msra.mxu0 0.0
        %1722 = vmatprep.subr.mxu0 0.0
        %1723 = vmatpush1.msra.mxu0 0.0
        %1724 = vmatprep.subr.mxu0 0.0
        %1725 = vmatpush1.msra.mxu0 0.0
        %1726 = vmatprep.subr.mxu0 0.0
        %1727 = vmatpush1.msra.mxu0 0.0
        %1728 = vmatprep.subr.mxu0 0.0
        %1729 = vmatpush1.msra.mxu0 0.0
        %1730 = vmatprep.subr.mxu0 0.0
        %1731 = vmatpush1.msra.mxu0 0.0
        %1732 = vmatprep.subr.mxu0 0.0
        %1733 = vmatpush1.msra.mxu0 0.0
        %1734 = vmatprep.subr.mxu0 0.0
        %1735 = vmatpush1.msra.mxu0 0.0
        %1736 = vmatprep.subr.mxu0 0.0
        %1737 = vmatpush1.msra.mxu0 0.0
        %1738 = vmatprep.subr.mxu0 0.0
        %1739 = vmatpush1.msra.mxu0 0.0
        %1740 = vmatprep.subr.mxu0 0.0
        %1741 = vmatpush1.msra.mxu0 0.0
        %1742 = vmatprep.subr.mxu0 0.0
        %1743 = vmatpush1.msra.mxu0 0.0
        %1744 = vmatprep.subr.mxu0 0.0
        %1745 = vmatpush1.msra.mxu0 0.0
        %1746 = vmatprep.subr.mxu0 0.0
        %1747 = vmatpush1.msra.mxu0 0.0
        %1748 = vmatprep.subr.mxu0 0.0
        %1749 = vmatpush1.msra.mxu0 0.0
        %1750 = vmatprep.subr.mxu0 0.0
        %1751 = vmatpush1.msra.mxu0 0.0
        %1752 = vmatprep.subr.mxu0 0.0
        %1753 = vmatpush1.msra.mxu0 0.0
        %1754 = vmatprep.subr.mxu0 0.0
        %1755 = vmatpush1.msra.mxu0 0.0
        %1756 = vmatprep.mubr.f32.mxu0 0.0
        %v1757 = vand.u32 %v1325, 4294901760
        %v1758 = vsub.f32 %v1325, %v1757
        %v1759 = vand.u32 %v1758, 4294901760
        %1760 = vmatmul.mubr.f32.gmra.mrb[0].mxu0 %v1759
        %v1761 = vpop.f32.mrb[0].mxu0
        %v1762 = vadd.f32 %v1669, %v1761
        %v1763 = vpop.f32.mrb[0].mxu0
        %1764 = vmatprep.mubr.f32.mxu0 0.0
        %v1765 = vand.u32 %v1328, 4294901760
        %v1766 = vsub.f32 %v1328, %v1765
        %v1767 = vand.u32 %v1766, 4294901760
        %1768 = vmatmul.mubr.f32.gmra.mrb[0].mxu0 %v1767
        %v1769 = vpop.f32.mrb[0].mxu0
        %v1770 = vadd.f32 %v1676, %v1769
        %v1771 = vpop.f32.mrb[0].mxu0
        %1772 = vdwg.mxu0
        %1773 = vmatprep.subr.mxu0 0.0
        %v1774 = vand.u32 %v1296, 4294901760
        %v1775 = vsub.f32 %v1296, %v1774
        %v1776 = vand.u32 %v1775, 4294901760
        %1777 = vmatpush1.msra.mxu0 %v1776
        %1778 = vmatprep.subr.mxu0 0.0
        %v1779 = vand.u32 %v1297, 4294901760
        %v1780 = vsub.f32 %v1297, %v1779
        %v1781 = vand.u32 %v1780, 4294901760
        %1782 = vmatpush1.msra.mxu0 %v1781
        %1783 = vmatprep.subr.mxu0 0.0
        %v1784 = vand.u32 %v1298, 4294901760
        %v1785 = vsub.f32 %v1298, %v1784
        %v1786 = vand.u32 %v1785, 4294901760
        %1787 = vmatpush1.msra.mxu0 %v1786
        %1788 = vmatprep.subr.mxu0 0.0
        %v1789 = vand.u32 %v1299, 4294901760
        %v1790 = vsub.f32 %v1299, %v1789
        %v1791 = vand.u32 %v1790, 4294901760
        %1792 = vmatpush1.msra.mxu0 %v1791
        %1793 = vmatprep.subr.mxu0 0.0
        %v1794 = vand.u32 %v1300, 4294901760
        %v1795 = vsub.f32 %v1300, %v1794
        %v1796 = vand.u32 %v1795, 4294901760
        %1797 = vmatpush1.msra.mxu0 %v1796
        %1798 = vmatprep.subr.mxu0 0.0
        %v1799 = vand.u32 %v1301, 4294901760
        %v1800 = vsub.f32 %v1301, %v1799
        %v1801 = vand.u32 %v1800, 4294901760
        %1802 = vmatpush1.msra.mxu0 %v1801
        %1803 = vmatprep.subr.mxu0 0.0
        %v1804 = vand.u32 %v1302, 4294901760
        %v1805 = vsub.f32 %v1302, %v1804
        %v1806 = vand.u32 %v1805, 4294901760
        %1807 = vmatpush1.msra.mxu0 %v1806
        %1808 = vmatprep.subr.mxu0 0.0
        %v1809 = vand.u32 %v1303, 4294901760
        %v1810 = vsub.f32 %v1303, %v1809
        %v1811 = vand.u32 %v1810, 4294901760
        %1812 = vmatpush1.msra.mxu0 %v1811
        %1813 = vmatprep.subr.mxu0 0.0
        %v1814 = vand.u32 %v1304, 4294901760
        %v1815 = vsub.f32 %v1304, %v1814
        %v1816 = vand.u32 %v1815, 4294901760
        %1817 = vmatpush1.msra.mxu0 %v1816
        %1818 = vmatprep.subr.mxu0 0.0
        %v1819 = vand.u32 %v1305, 4294901760
        %v1820 = vsub.f32 %v1305, %v1819
        %v1821 = vand.u32 %v1820, 4294901760
        %1822 = vmatpush1.msra.mxu0 %v1821
        %1823 = vmatprep.subr.mxu0 0.0
        %v1824 = vand.u32 %v1306, 4294901760
        %v1825 = vsub.f32 %v1306, %v1824
        %v1826 = vand.u32 %v1825, 4294901760
        %1827 = vmatpush1.msra.mxu0 %v1826
        %1828 = vmatprep.subr.mxu0 0.0
        %v1829 = vand.u32 %v1307, 4294901760
        %v1830 = vsub.f32 %v1307, %v1829
        %v1831 = vand.u32 %v1830, 4294901760
        %1832 = vmatpush1.msra.mxu0 %v1831
        %1833 = vmatprep.subr.mxu0 0.0
        %v1834 = vand.u32 %v1332, 4294901760
        %v1835 = vsub.f32 %v1332, %v1834
        %v1836 = vand.u32 %v1835, 4294901760
        %1837 = vmatpush1.msra.mxu0 %v1836
        %1838 = vmatprep.subr.mxu0 0.0
        %1839 = vmatpush1.msra.mxu0 0.0
        %1840 = vmatprep.subr.mxu0 0.0
        %1841 = vmatpush1.msra.mxu0 0.0
        %1842 = vmatprep.subr.mxu0 0.0
        %1843 = vmatpush1.msra.mxu0 0.0
        %1844 = vmatprep.subr.mxu0 0.0
        %1845 = vmatpush1.msra.mxu0 0.0
        %1846 = vmatprep.subr.mxu0 0.0
        %1847 = vmatpush1.msra.mxu0 0.0
        %1848 = vmatprep.subr.mxu0 0.0
        %1849 = vmatpush1.msra.mxu0 0.0
        %1850 = vmatprep.subr.mxu0 0.0
        %1851 = vmatpush1.msra.mxu0 0.0
        %1852 = vmatprep.subr.mxu0 0.0
        %1853 = vmatpush1.msra.mxu0 0.0
        %1854 = vmatprep.subr.mxu0 0.0
        %1855 = vmatpush1.msra.mxu0 0.0
        %1856 = vmatprep.subr.mxu0 0.0
        %1857 = vmatpush1.msra.mxu0 0.0
        %1858 = vmatprep.subr.mxu0 0.0
        %1859 = vmatpush1.msra.mxu0 0.0
        %1860 = vmatprep.subr.mxu0 0.0
        %1861 = vmatpush1.msra.mxu0 0.0
        %1862 = vmatprep.subr.mxu0 0.0
        %1863 = vmatpush1.msra.mxu0 0.0
        %1864 = vmatprep.subr.mxu0 0.0
        %1865 = vmatpush1.msra.mxu0 0.0
        %1866 = vmatprep.subr.mxu0 0.0
        %1867 = vmatpush1.msra.mxu0 0.0
        %1868 = vmatprep.subr.mxu0 0.0
        %1869 = vmatpush1.msra.mxu0 0.0
        %1870 = vmatprep.subr.mxu0 0.0
        %1871 = vmatpush1.msra.mxu0 0.0
        %1872 = vmatprep.subr.mxu0 0.0
        %1873 = vmatpush1.msra.mxu0 0.0
        %1874 = vmatprep.subr.mxu0 0.0
        %1875 = vmatpush1.msra.mxu0 0.0
        %1876 = vmatprep.mubr.f32.mxu0 0.0
        %v1877 = vand.u32 %v1325, 4294901760
        %1878 = vmatmul.mubr.f32.gmra.mrb[0].mxu0 %v1877
        %v1879 = vpop.f32.mrb[0].mxu0
        %v1880 = vadd.f32 %v1762, %v1879
        %v1881 = vpop.f32.mrb[0].mxu0
        %1882 = vmatprep.mubr.f32.mxu0 0.0
        %v1883 = vand.u32 %v1328, 4294901760
        %1884 = vmatmul.mubr.f32.gmra.mrb[0].mxu0 %v1883
        %v1885 = vpop.f32.mrb[0].mxu0
        %v1886 = vadd.f32 %v1770, %v1885
        %v1887 = vpop.f32.mrb[0].mxu0
        %1888 = vdwg.mxu0
        %1889 = vmatprep.subr.mxu0 0.0
        %v1890 = vand.u32 %v1296, 4294901760
        %1891 = vmatpush1.msra.mxu0 %v1890
        %1892 = vmatprep.subr.mxu0 0.0
        %v1893 = vand.u32 %v1297, 4294901760
        %1894 = vmatpush1.msra.mxu0 %v1893
        %1895 = vmatprep.subr.mxu0 0.0
        %v1896 = vand.u32 %v1298, 4294901760
        %1897 = vmatpush1.msra.mxu0 %v1896
        %1898 = vmatprep.subr.mxu0 0.0
        %v1899 = vand.u32 %v1299, 4294901760
        %1900 = vmatpush1.msra.mxu0 %v1899
        %1901 = vmatprep.subr.mxu0 0.0
        %v1902 = vand.u32 %v1300, 4294901760
        %1903 = vmatpush1.msra.mxu0 %v1902
        %1904 = vmatprep.subr.mxu0 0.0
        %v1905 = vand.u32 %v1301, 4294901760
        %1906 = vmatpush1.msra.mxu0 %v1905
        %1907 = vmatprep.subr.mxu0 0.0
        %v1908 = vand.u32 %v1302, 4294901760
        %1909 = vmatpush1.msra.mxu0 %v1908
        %1910 = vmatprep.subr.mxu0 0.0
        %v1911 = vand.u32 %v1303, 4294901760
        %1912 = vmatpush1.msra.mxu0 %v1911
        %1913 = vmatprep.subr.mxu0 0.0
        %v1914 = vand.u32 %v1304, 4294901760
        %1915 = vmatpush1.msra.mxu0 %v1914
        %1916 = vmatprep.subr.mxu0 0.0
        %v1917 = vand.u32 %v1305, 4294901760
        %1918 = vmatpush1.msra.mxu0 %v1917
        %1919 = vmatprep.subr.mxu0 0.0
        %v1920 = vand.u32 %v1306, 4294901760
        %1921 = vmatpush1.msra.mxu0 %v1920
        %1922 = vmatprep.subr.mxu0 0.0
        %v1923 = vand.u32 %v1307, 4294901760
        %1924 = vmatpush1.msra.mxu0 %v1923
        %1925 = vmatprep.subr.mxu0 0.0
        %v1926 = vand.u32 %v1332, 4294901760
        %1927 = vmatpush1.msra.mxu0 %v1926
        %1928 = vmatprep.subr.mxu0 0.0
        %1929 = vmatpush1.msra.mxu0 0.0
        %1930 = vmatprep.subr.mxu0 0.0
        %1931 = vmatpush1.msra.mxu0 0.0
        %1932 = vmatprep.subr.mxu0 0.0
        %1933 = vmatpush1.msra.mxu0 0.0
        %1934 = vmatprep.subr.mxu0 0.0
        %1935 = vmatpush1.msra.mxu0 0.0
        %1936 = vmatprep.subr.mxu0 0.0
        %1937 = vmatpush1.msra.mxu0 0.0
        %1938 = vmatprep.subr.mxu0 0.0
        %1939 = vmatpush1.msra.mxu0 0.0
        %1940 = vmatprep.subr.mxu0 0.0
        %1941 = vmatpush1.msra.mxu0 0.0
        %1942 = vmatprep.subr.mxu0 0.0
        %1943 = vmatpush1.msra.mxu0 0.0
        %1944 = vmatprep.subr.mxu0 0.0
        %1945 = vmatpush1.msra.mxu0 0.0
        %1946 = vmatprep.subr.mxu0 0.0
        %1947 = vmatpush1.msra.mxu0 0.0
        %1948 = vmatprep.subr.mxu0 0.0
        %1949 = vmatpush1.msra.mxu0 0.0
        %1950 = vmatprep.subr.mxu0 0.0
        %1951 = vmatpush1.msra.mxu0 0.0
        %1952 = vmatprep.subr.mxu0 0.0
        %1953 = vmatpush1.msra.mxu0 0.0
        %1954 = vmatprep.subr.mxu0 0.0
        %1955 = vmatpush1.msra.mxu0 0.0
        %1956 = vmatprep.subr.mxu0 0.0
        %1957 = vmatpush1.msra.mxu0 0.0
        %1958 = vmatprep.subr.mxu0 0.0
        %1959 = vmatpush1.msra.mxu0 0.0
        %1960 = vmatprep.subr.mxu0 0.0
        %1961 = vmatpush1.msra.mxu0 0.0
        %1962 = vmatprep.subr.mxu0 0.0
        %1963 = vmatpush1.msra.mxu0 0.0
        %1964 = vmatprep.subr.mxu0 0.0
        %1965 = vmatpush1.msra.mxu0 0.0
        %1966 = vmatprep.mubr.f32.mxu0 0.0
        %v1967 = vand.u32 %v1325, 4294901760
        %1968 = vmatmul.mubr.f32.gmra.mrb[0].mxu0 %v1967
        %v1969 = vpop.f32.mrb[0].mxu0
        %v1970 = vadd.f32 %v1880, %v1969
        %v1971 = vpop.f32.mrb[0].mxu0
        %1972 = vmatprep.mubr.f32.mxu0 0.0
        %v1973 = vand.u32 %v1328, 4294901760
        %1974 = vmatmul.mubr.f32.gmra.mrb[0].mxu0 %v1973
        %v1975 = vpop.f32.mrb[0].mxu0
        %v1976 = vadd.f32 %v1886, %v1975
        %v1977 = vpop.f32.mrb[0].mxu0
        %1978 = vdwg.mxu0
        %v1979 = vmax.f32 %v1970, 0.0
        %v1980 = vmax.f32 %v1976, 0.0
        %v1981 = vld [vmem:[#allocation2 + $0x110] sm:$0xff]
        %v1982 = vld [vmem:[#allocation2 + $0x118] sm:$0x3]
        %v1983 = vld [vmem:[#allocation2 + $0x120] sm:$0x1]
        %1985 = vset.pattern.permute.xlu0 0
        %1986 = vperm.xlu0 %1985, %v1981
        %v1987 = vpop.permute.xlu0 %1986
        %1990 = vset.pattern.permute.xlu0 0
        %1991 = vperm.xlu0 %1990, %v1982
        %v1992 = vpop.permute.xlu0 %1991
        %v1994 = vmul.f32 %v1987, %v1979
        %v1995 = vmul.f32 %v1992, %v1980
        %v1996 = vsel %vm317, %v1995, 0.0
        %v1997 = vadd.f32 %v1994, %v1996
        %v1998 = vrot.slane %v1997, 4
        %v1999 = vadd.f32 %v1997, %v1998
        %v2000 = vrot.slane %v1999, 2
        %v2001 = vadd.f32 %v1999, %v2000
        %v2002 = vrot.slane %v2001, 1
        %v2003 = vadd.f32 %v2001, %v2002
        %2005 = vset.pattern.permute.xlu0 0
        %2006 = vperm.xlu0 %2005, %v1983
        %v2007 = vpop.permute.xlu0 %2006
        %v2009 = vadd.f32 %v2003, %v2007
        %2010 = vst [vmem:[%s148] sm:$0x1] %v2009
        %p2011 = scmp.lt.s32.totalorder %s14, 3
        %s2012 = scalar_select %p2011, %s14, 3
        %s2013 = scalar_lea.vmem %s2, %s2012
        // Predicated region
        $region33: #{mlp_forward.1} parent=27 // pred_check
          %p2014 = pneg %p79
        $region34: #{mlp_forward.1} parent=27 // pred_check_branch
          %2016 = sbr.rel (%p2014) target = $region36
        $region35: #{mlp_forward.1} parent=27 // pred_region
          _
        $region36: #{mlp_forward.1} parent=27 // pred_fallthru
          _
      $region28: #{mlp_forward.1} parent=5 // pred_fallthru
        _
      %p2017 = scmp.le.s32.totalorder 2, %s9
      // Predicated region
      $region37: #{mlp_forward.1} parent=5 // pred_check
        %p2018 = pneg %p2017
      $region38: #{mlp_forward.1} parent=5 // pred_check_branch
        %2020 = sbr.rel (%p2018) target = $region40
      $region39: #{mlp_forward.1} parent=5 // pred_region
        %s2021 = ssub.s32 %s9, 2
        // Predicated region
        $region41: #{mlp_forward.1} parent=39 // pred_check
          %p2022 = pneg %p85
        $region42: #{mlp_forward.1} parent=39 // pred_check_branch
          %2024 = sbr.rel (%p2022) target = $region44
        $region43: #{mlp_forward.1} parent=39 // pred_region
          %p2025 = scmp.lt.s32.totalorder %s15, 3
          %s2026 = scalar_select %p2025, %s15, 3
          %s2027 = scalar_lea.vmem %s2, %s2026
        $region44: #{mlp_forward.1} parent=39 // pred_fallthru
          _
      $region40: #{mlp_forward.1} parent=5 // pred_fallthru
        _
    $region6: #{mlp_forward.1} parent=1 // loop_footer
      %s13 = sadd.s32 1, %s9
    $region7: #{mlp_forward.1} parent=1 // loop_footer_branch
      %8 = sbr.rel target = $region3
    $region8: #{mlp_forward.1} parent=1 // loop_exit
      _
    %2028 = vsyncpa [#allocation3], 1
    %s2029 = scalar_lea.sflag [#allocation3], 1
    %2030 = vsyncpa %s2029, 1

</llo_original>
